<compile_context>
chip_gen: v7x
topology: tpu7x:2x2x1
jax: 0.10.0
libtpu: 0.0.40
codegen_flags: <defaults>
</compile_context>

<pallas_src>
import functools
from types import SimpleNamespace

import numpy as np
import jax
import jax.numpy as jnp
from jax import lax
from jax.experimental import pallas as pl
from jax.experimental.pallas import tpu as pltpu

EPS = 0.01       # same eps as get_cardinal_neighbors
NCHUNK = 128     # track chunk size inside the kernel (multiple of 128)


def get_rainbow_colors(size):
    # TODO(synk): matplotlib 'jet' colormap not available in-script; this is the
    # standard piecewise-linear jet approximation (deterministic).
    t = np.arange(size, dtype=np.float32) / max(size - 1, 1)
    r = np.clip(1.5 - np.abs(4.0 * t - 3.0), 0.0, 1.0)
    g = np.clip(1.5 - np.abs(4.0 * t - 2.0), 0.0, 1.0)
    b = np.clip(1.5 - np.abs(4.0 * t - 1.0), 0.0, 1.0)
    return np.stack([r, g, b], axis=-1).astype(np.float32)  # (size, 3)


# --------------------------------- kernel -----------------------------------
def _overlay_kernel(counts_ref, base_ref, wts_ref, col_ref, video_ref, out_ref,
                    *, overlay_factor, w_stride):
    """One grid step == (frame t, pixel tile p).

    counts_ref: (T*P,) int32 in SMEM -- #valid track-neighbors hitting tile p of frame t
    base_ref:   (n_chunks, NCHUNK, 1) int32 -- flat index of the NW corner (signed;
                huge-negative sentinel for tracks with no valid neighbor)
    wts_ref:    (n_chunks, NCHUNK, 4) f32   -- bilinear weights [nw, sw, ne, se]
                (0 where the neighbor is invisible / out of bounds)
    col_ref:    (n_chunks, 4, NCHUNK) f32   -- [rainbow colors ; ones] per chunk
    video_ref:  (C, TILE_HW) -- this frame's pixel tile
    out_ref:    (C, TILE_HW)
    """
    t = pl.program_id(0)
    p = pl.program_id(1)
    count = counts_ref[t * pl.num_programs(1) + p]

    # Fast path: no track touches this tile -> plain copy.
    @pl.when(count == 0)
    def _():
        out_ref[...] = video_ref[...].astype(out_ref.dtype)

    @pl.when(count > 0)
    def _():
        n_chunks = base_ref.shape[0]
        tile_hw = video_ref.shape[-1]
        # Global lane index of every pixel in this tile (hoisted out of the loop).
        lane = p * tile_hw + lax.broadcasted_iota(jnp.int32, (1, tile_hw), 1)

        def chunk_body(c, rgba):
            base = base_ref[c]                      # (NCHUNK, 1) int32
            w = wts_ref[c]                          # (NCHUNK, 4) f32
            d = lane - base                         # (NCHUNK, TILE_HW)
            # Fused 4-term splat: neighbors live at offsets 0 (nw), 1 (ne),
            # W (sw), W+1 (se) from the NW corner; invalid ones have weight 0.
            acc = (jnp.where(d == 0, w[:, 0:1], 0.0)
                   + jnp.where(d == 1, w[:, 2:3], 0.0)
                   + jnp.where(d == w_stride, w[:, 1:2], 0.0)
                   + jnp.where(d == w_stride + 1, w[:, 3:4], 0.0))
            # scatter_add(frame, idx, [w*col, w]) == (4, NCHUNK) @ (NCHUNK, TILE_HW)
            # MXU has slack here (not the binding unit); Mosaic's dot lowering
            # only supports DEFAULT/HIGHEST so HIGHEST is kept for the 1e-4 check.
            return rgba + lax.dot_general(
                col_ref[c], acc, (((1,), (0,)), ((), ())),
                preferred_element_type=jnp.float32,
                precision=lax.Precision.HIGHEST)

        rgba0 = jnp.zeros((4, tile_hw), jnp.float32)
        if n_chunks == 1:
            rgba = chunk_body(0, rgba0)
        else:
            rgba = lax.fori_loop(0, n_chunks, chunk_body, rgba0)

        rgb = rgba[0:3, :]
        a = rgba[3:4, :]

        # normalize touched pixels by accumulated alpha (draw() semantics)
        nonzero = a > 0.0
        inv = pl.reciprocal(jnp.where(nonzero, a, 1.0), approx=False)
        rainbow = rgb * inv                                     # (3, TILE_HW)

        # overlay compositing: out = v + fa * (rainbow - v)
        fa = overlay_factor * nonzero.astype(jnp.float32)       # (1, TILE_HW)
        v = video_ref[...].astype(jnp.float32)
        out_ref[...] = (v + fa * (rainbow - v)).astype(out_ref.dtype)


# ------------------------------ tiling / budget ------------------------------
def _vmem_limit_bytes():
    cap = 128 * 1024 * 1024
    try:
        info = pltpu.get_tpu_info()
        cap = int(getattr(info, "vmem_capacity_bytes", cap)) or cap
    except Exception:
        pass
    # Leave headroom below physical VMEM (compiler scratch, misc buffers).
    # 64 MiB -> 48 MiB limit on v7x; 128 MiB -> ~96 MiB on v5e/v6e.
    return min(cap * 3 // 4, 100 * 1024 * 1024)


def _pick_tile(HW, C, n_pad, n_chunk, budget_bytes, max_tile=None):
    """Largest lane-dense pixel tile whose working set fits the VMEM budget,
    preferring tiles that minimize padded-tail traffic."""
    # Fixed residents (double-buffered): lane-padded per-track blocks + colors.
    fixed = 2 * 2 * (128 * 4 * n_pad)      # base (int32) + wts (f32), 128-lane padded
    fixed += 2 * (8 * 4 * n_pad)           # per-chunk color blocks (4 -> 8 sublanes)
    # Per-pixel-lane bytes: double-buffered video in/out + chunk temporaries
    # (d, select temps, acc) + rgba accumulator.
    per_lane = 2 * 2 * C * 4 + 4 * (n_chunk * 4) + 2 * 4 * 4
    cap = (budget_bytes - fixed) // per_lane
    cap = max(512, min(int(cap) // 128 * 128, 32768))
    if max_tile is not None:
        cap = max(512, min(cap, int(max_tile) // 128 * 128))
    if HW <= cap:
        return HW
    # Minimize padded-tail traffic without exploding the grid-step count
    # (search only down to cap/2); ties keep the larger tile.
    best_t = cap
    best_waste = (-(-HW // cap)) * cap - HW
    t = cap - 128
    lo = max(512, cap // 2)
    while t >= lo and best_waste > 0:
        waste = (-(-HW // t)) * t - HW
        if waste < best_waste:
            best_t, best_waste = t, waste
        t -= 128
    return best_t


# ------------------------------- precompute ---------------------------------
def _precompute_splat(tracks, H, W, tile_hw, num_tiles, n_pad):
    """Per-track NW-corner flat index, 4 bilinear weights, and a per-(frame, tile)
    occupancy count used to skip empty tiles."""
    T, N, _ = tracks.shape
    x = tracks[..., 0]
    y = tracks[..., 1]
    vis = tracks[..., 2] > 0.0

    fx = jnp.floor(x)
    fy = jnp.floor(y)
    w_n = fy + 1.0 - y + EPS
    w_s = y - fy + EPS
    w_w = fx + 1.0 - x + EPS
    w_e = x - fx + EPS

    # neighbor order nw, sw, ne, se  ->  flat offsets 0, W, 1, W+1 from base
    nx = jnp.stack([fx, fx, fx + 1.0, fx + 1.0], axis=-1)            # (T, N, 4)
    ny = jnp.stack([fy, fy + 1.0, fy, fy + 1.0], axis=-1)            # (T, N, 4)
    w = jnp.stack([w_n * w_w, w_s * w_w, w_n * w_e, w_s * w_e], -1)  # (T, N, 4)

    inb = (nx >= 0.0) & (nx <= W - 1.0) & (ny >= 0.0) & (ny <= H - 1.0)
    valid = vis[..., None] & inb
    w = jnp.where(valid, w, 0.0).astype(jnp.float32)   # invalid neighbors add exactly 0

    base = fy.astype(jnp.int32) * W + fx.astype(jnp.int32)           # signed, may be OOB
    base = jnp.where(valid.any(-1), base, jnp.int32(-(2 ** 30)))     # never matches a lane

    # Occupancy: number of valid neighbors landing in each (frame, tile).
    offs = jnp.array([0, W, 1, W + 1], jnp.int32)
    nb = base[..., None] + offs                                      # (T, N, 4)
    tile_of = jnp.clip(nb, 0, num_tiles * tile_hw - 1) // tile_hw
    t_ix = jnp.broadcast_to(jnp.arange(T)[:, None, None], nb.shape)
    counts = jnp.zeros((T, num_tiles), jnp.int32).at[t_ix, tile_of].add(
        valid.astype(jnp.int32))
    counts = counts.reshape(T * num_tiles)   # flat 1D -> cheap SMEM padding

    pad = n_pad - N
    base = jnp.pad(base, ((0, 0), (0, pad)), constant_values=-(2 ** 30))
    w = jnp.pad(w, ((0, 0), (0, pad), (0, 0)))
    return base, w, counts


# --------------------------------- wrapper -----------------------------------
def plot_overlay_pallas(video, tracks, col, overlay_factor, out_dtype=None,
                        max_tile_hw=None):
    """video: (T, C, H, W); tracks: (T, N, 3) f32; col: (N, 3) f32."""
    video = jnp.asarray(video)
    tracks = jnp.asarray(tracks, jnp.float32)
    T, C, H, W = video.shape
    N = tracks.shape[1]
    HW = H * W
    assert HW < 2 ** 30, "flat pixel index must fit comfortably in int32"
    out_dtype = video.dtype if out_dtype is None else out_dtype

    n_chunks = max(1, -(-N // NCHUNK))
    n_pad = n_chunks * NCHUNK

    limit = _vmem_limit_bytes()
    tile_hw = _pick_tile(HW, C, n_pad, NCHUNK, int(limit * 0.8), max_tile_hw)
    num_tiles = -(-HW // tile_hw)

    video_flat = video.reshape(T, C, HW)
    base, wts, counts = _precompute_splat(tracks, H, W, tile_hw, num_tiles, n_pad)
    base = base.reshape(T, n_chunks, NCHUNK, 1)
    wts = wts.reshape(T, n_chunks, NCHUNK, 4)

    # (4, N): rainbow colors (transposed) + a row of ones so alpha comes out of
    # the same MXU contraction; pre-split into lane-dense per-chunk blocks.
    col4 = jnp.concatenate(
        [jnp.transpose(jnp.asarray(col, jnp.float32)),
         jnp.ones((1, N), jnp.float32)], axis=0)
    col4 = jnp.pad(col4, ((0, 0), (0, n_pad - N)))
    col_chunks = jnp.transpose(col4.reshape(4, n_chunks, NCHUNK), (1, 0, 2))

    kernel = functools.partial(_overlay_kernel,
                               overlay_factor=float(overlay_factor),
                               w_stride=int(W))
    out = pl.pallas_call(
        kernel,
        out_shape=jax.ShapeDtypeStruct((T, C, HW), out_dtype),
        grid_spec=pltpu.PrefetchScalarGridSpec(
            num_scalar_prefetch=1,             # occupancy counts -> SMEM
            grid=(T, num_tiles),
            in_specs=[
                pl.BlockSpec((None, n_chunks, NCHUNK, 1),
                             lambda t, p, cnt: (t, 0, 0, 0)),              # base[t]
                pl.BlockSpec((None, n_chunks, NCHUNK, 4),
                             lambda t, p, cnt: (t, 0, 0, 0)),              # wts[t]
                pl.BlockSpec((n_chunks, 4, NCHUNK),
                             lambda t, p, cnt: (0, 0, 0)),                 # colors
                pl.BlockSpec((None, C, tile_hw),
                             lambda t, p, cnt: (t, 0, p)),                 # video tile
            ],
            out_specs=pl.BlockSpec((None, C, tile_hw), lambda t, p, cnt: (t, 0, p)),
        ),
        compiler_params=pltpu.CompilerParams(
            dimension_semantics=("parallel", "parallel"),
            vmem_limit_bytes=int(limit),
        ),
    )(counts, base, wts, col_chunks, video_flat)
    return out.reshape(T, C, H, W)


class Visualizer:
    """JAX/Pallas port of demo.Visualizer.  Overlay path is implemented; the
    original forward() also writes an mp4 (file I/O) which is out of scope —
    the composited video tensor is returned instead."""

    def __init__(self, args):
        self.save_mode = args.save_mode
        self.overlay_factor = args.overlay_factor
        self.spaghetti_radius = args.spaghetti_radius
        self.spaghetti_length = args.spaghetti_length
        self.spaghetti_grid = args.spaghetti_grid
        self.spaghetti_scale = args.spaghetti_scale
        self.spaghetti_every = args.spaghetti_every
        self.spaghetti_dropout = args.spaghetti_dropout

    def __call__(self, data, mode):
        if 'overlay' in mode:
            return self.plot_overlay(data, mode)
        # TODO(synk): 'spaghetti' mode needs scipy CubicSpline interpolation and
        # grid_sample-based translation; no clean Pallas equivalent here.
        raise ValueError(f'Unsupported mode {mode}')

    def plot_overlay(self, data, mode):
        video = data['video']      # (T, C, H, W)
        tracks = data['tracks']    # (T, N, 3)
        col = get_rainbow_colors(int(tracks.shape[1]))
        return plot_overlay_pallas(video, tracks, col, self.overlay_factor)


# ---------------- pure-numpy reference (mirrors the PyTorch code) ----------------
def _ref_plot_overlay(video, tracks, col, overlay_factor):
    T, C, H, W = video.shape
    out = np.zeros_like(video, dtype=np.float32)
    for t in range(T):
        frame = np.zeros((H * W, 4), np.float32)
        vis = tracks[t, :, 2] > 0
        p = tracks[t, vis, :2]
        c = col[vis]
        x, y = p[:, 0], p[:, 1]
        fx, fy = np.floor(x), np.floor(y)
        w_n = fy + 1 - y + EPS
        w_s = y - fy + EPS
        w_w = fx + 1 - x + EPS
        w_e = x - fx + EPS
        for nx, ny, w in ((fx, fy, w_n * w_w), (fx, fy + 1, w_s * w_w),
                          (fx + 1, fy, w_n * w_e), (fx + 1, fy + 1, w_s * w_e)):
            inb = (nx >= 0) & (nx <= W - 1) & (ny >= 0) & (ny <= H - 1)
            idx = (np.round(ny).astype(np.int64) * W + np.round(nx).astype(np.int64))[inb]
            contrib = np.concatenate([w[:, None] * c, w[:, None]], axis=-1)[inb]
            np.add.at(frame, idx, contrib)
        frame = frame.reshape(H, W, 4)
        rgb, a = frame[..., :3].copy(), frame[..., 3]
        nz = a > 0
        rgb[nz] /= a[nz][..., None]
        alpha = nz[..., None].astype(np.float32)
        tgt = video[t].transpose(1, 2, 0)
        tgt = overlay_factor * alpha * rgb + (1 - overlay_factor * alpha) * tgt
        out[t] = tgt.transpose(2, 0, 1)
    return out


if __name__ == "__main__":
    args = SimpleNamespace(save_mode='array', overlay_factor=0.75,
                           spaghetti_radius=1.5, spaghetti_length=2,
                           spaghetti_grid=8, spaghetti_scale=2,
                           spaghetti_every=2, spaghetti_dropout=0.0)
    viz = Visualizer(args)

    # ---- test 1: tiny shapes through the Visualizer API (single tile, 1 chunk)
    T, C, H, W, N = 4, 3, 16, 16, 8
    key = jax.random.PRNGKey(0)
    k1, k2, k3 = jax.random.split(key, 3)
    video = jax.random.uniform(k1, (T, C, H, W), jnp.float32)
    # track positions partly out of bounds to exercise the inbound mask
    pos = jax.random.uniform(k2, (T, N, 2), jnp.float32, minval=-1.0, maxval=float(W))
    vis = (jax.random.uniform(k3, (T, N, 1)) > 0.2).astype(jnp.float32)
    tracks = jnp.concatenate([pos, vis], axis=-1)

    out = viz({'video': video, 'tracks': tracks}, mode='overlay')
    out = jax.block_until_ready(out)
    ref = _ref_plot_overlay(np.asarray(video), np.asarray(tracks),
                            get_rainbow_colors(N), args.overlay_factor)
    np.testing.assert_allclose(np.asarray(out), ref, rtol=1e-4, atol=1e-4)

    # ---- test 2: exercise multi-tile + chunked-track paths (still small)
    T2, C2, H2, W2, N2 = 2, 3, 64, 64, 200
    k4, k5, k6 = jax.random.split(jax.random.PRNGKey(0), 3)
    video2 = jax.random.uniform(k4, (T2, C2, H2, W2), jnp.float32)
    pos2 = jax.random.uniform(k5, (T2, N2, 2), jnp.float32, minval=-1.0, maxval=float(W2))
    vis2 = (jax.random.uniform(k6, (T2, N2, 1)) > 0.2).astype(jnp.float32)
    tracks2 = jnp.concatenate([pos2, vis2], axis=-1)
    col2 = get_rainbow_colors(N2)
    out2 = plot_overlay_pallas(video2, tracks2, col2, args.overlay_factor,
                               max_tile_hw=2048)   # forces 2 pixel tiles, 2 track chunks
    out2 = jax.block_until_ready(out2)
    ref2 = _ref_plot_overlay(np.asarray(video2), np.asarray(tracks2), col2,
                             args.overlay_factor)
    np.testing.assert_allclose(np.asarray(out2), ref2, rtol=1e-4, atol=1e-4)

    print("KERNEL_OK")
</pallas_src>

<mosaic_0001>
module attributes {stable_mosaic.version = 11 : i64} {
  func.func @_overlay_kernel(%arg0: i32, %arg1: i32, %arg2: memref<4xi32, #tpu.memory_space<smem>>, %arg3: memref<1x1x128x1xi32, #tpu.memory_space<vmem>>, %arg4: memref<1x1x128x4xf32, #tpu.memory_space<vmem>>, %arg5: memref<1x4x128xf32, #tpu.memory_space<vmem>>, %arg6: memref<1x3x256xf32, #tpu.memory_space<vmem>>, %arg7: memref<1x3x256xf32, #tpu.memory_space<vmem>>) attributes {dimension_semantics = [#tpu.dimension_semantics<parallel>, #tpu.dimension_semantics<parallel>], iteration_bounds = array<i64: 4, 1>, scalar_prefetch = 1 : i64, scratch_operands = 0 : i64, tpu.core_type = #tpu.core_type<tc>, window_params = [{transform_indices = @transform_0, window_bounds = array<i64: 1, 1, 128, 1>}, {transform_indices = @transform_1, window_bounds = array<i64: 1, 1, 128, 4>}, {pipeline_mode = #tpu.pipeline_mode<synchronous>, transform_indices = @transform_2, window_bounds = array<i64: 1, 4, 128>}, {transform_indices = @transform_3, window_bounds = array<i64: 1, 3, 256>}, {transform_indices = @transform_4, window_bounds = array<i64: 1, 3, 256>}]} {
    %c1_i32 = arith.constant 1 : i32
    %0 = arith.muli %arg0, %c1_i32 : i32
    %1 = arith.addi %0, %arg1 : i32
    %2 = arith.index_cast %1 : i32 to index
    %3 = memref.load %arg2[%2] : memref<4xi32, #tpu.memory_space<smem>>
    %c0_i32 = arith.constant 0 : i32
    %4 = arith.cmpi eq, %3, %c0_i32 : i32
    %5 = arith.extui %4 : i1 to i32
    %c0_i32_0 = arith.constant 0 : i32
    %6 = arith.cmpi ne, %5, %c0_i32_0 : i32
    scf.if %6 {
      %c0 = arith.constant 0 : index
      %c0_3 = arith.constant 0 : index
      %c0_4 = arith.constant 0 : index
      %10 = vector.load %arg6[%c0, %c0_3, %c0_4] : memref<1x3x256xf32, #tpu.memory_space<vmem>>, vector<1x3x256xf32>
      %11 = vector.shape_cast %10 : vector<1x3x256xf32> to vector<3x256xf32>
      %c0_5 = arith.constant 0 : index
      %c0_6 = arith.constant 0 : index
      %c0_7 = arith.constant 0 : index
      %12 = vector.load %arg7[%c0_5, %c0_6, %c0_7] : memref<1x3x256xf32, #tpu.memory_space<vmem>>, vector<1x3x256xf32>
      %13 = vector.shape_cast %12 : vector<1x3x256xf32> to vector<3x256xf32>
      %14 = vector.shape_cast %11 : vector<3x256xf32> to vector<1x3x256xf32>
      tpu.vector_store %arg7[%c0_5, %c0_6, %c0_7], %14 {strides = array<i32>} : memref<1x3x256xf32, #tpu.memory_space<vmem>>, vector<1x3x256xf32>,
    } else {
    }
    %c0_i32_1 = arith.constant 0 : i32
    %7 = arith.cmpi sgt, %3, %c0_i32_1 : i32
    %8 = arith.extui %7 : i1 to i32
    %c0_i32_2 = arith.constant 0 : i32
    %9 = arith.cmpi ne, %8, %c0_i32_2 : i32
    scf.if %9 {
      %c256_i32 = arith.constant 256 : i32
      %10 = arith.muli %arg1, %c256_i32 : i32
      %11 = tpu.iota {dimensions = array<i32: 1>} : vector<1x256xi32>
      %12 = vector.broadcast %10 : i32 to vector<1x256xi32>
      %13 = arith.addi %12, %11 : vector<1x256xi32>
      %cst = arith.constant 0.000000e+00 : f32
      %14 = vector.broadcast %cst : f32 to vector<4x256xf32>
      %c0 = arith.constant 0 : index
      %c0_3 = arith.constant 0 : index
      %c0_4 = arith.constant 0 : index
      %c0_5 = arith.constant 0 : index
      %15 = vector.load %arg3[%c0, %c0_3, %c0_4, %c0_5] : memref<1x1x128x1xi32, #tpu.memory_space<vmem>>, vector<1x1x128x1xi32>
      %16 = vector.shape_cast %15 : vector<1x1x128x1xi32> to vector<128x1xi32>
      %c0_6 = arith.constant 0 : index
      %c0_7 = arith.constant 0 : index
      %c0_8 = arith.constant 0 : index
      %c0_9 = arith.constant 0 : index
      %17 = vector.load %arg4[%c0_6, %c0_7, %c0_8, %c0_9] : memref<1x1x128x4xf32, #tpu.memory_space<vmem>>, vector<1x1x128x4xf32>
      %18 = vector.shape_cast %17 : vector<1x1x128x4xf32> to vector<128x4xf32>
      %19 = vector.broadcast %13 : vector<1x256xi32> to vector<128x256xi32>
      %20 = vector.broadcast %16 : vector<128x1xi32> to vector<128x256xi32>
      %21 = arith.subi %19, %20 : vector<128x256xi32>
      %c0_i32_10 = arith.constant 0 : i32
      %22 = vector.broadcast %c0_i32_10 : i32 to vector<128x256xi32>
      %23 = arith.cmpi eq, %21, %22 : vector<128x256xi32>
      %24 = vector.extract_strided_slice %18 {offsets = [0, 0], sizes = [128, 1], strides = [1, 1]} : vector<128x4xf32> to vector<128x1xf32>
      %cst_11 = arith.constant 0.000000e+00 : f32
      %25 = vector.shape_cast %24 : vector<128x1xf32> to vector<128x1xf32>
      %26 = vector.broadcast %25 : vector<128x1xf32> to vector<128x256xf32>
      %27 = vector.broadcast %cst_11 : f32 to vector<128x256xf32>
      %28 = arith.select %23, %26, %27 : vector<128x256xi1>, vector<128x256xf32>
      %c1_i32_12 = arith.constant 1 : i32
      %29 = vector.broadcast %c1_i32_12 : i32 to vector<128x256xi32>
      %30 = arith.cmpi eq, %21, %29 : vector<128x256xi32>
      %31 = vector.extract_strided_slice %18 {offsets = [0, 2], sizes = [128, 1], strides = [1, 1]} : vector<128x4xf32> to vector<128x1xf32>
      %cst_13 = arith.constant 0.000000e+00 : f32
      %32 = vector.shape_cast %31 : vector<128x1xf32> to vector<128x1xf32>
      %33 = vector.broadcast %32 : vector<128x1xf32> to vector<128x256xf32>
      %34 = vector.broadcast %cst_13 : f32 to vector<128x256xf32>
      %35 = arith.select %30, %33, %34 : vector<128x256xi1>, vector<128x256xf32>
      %36 = arith.addf %28, %35 : vector<128x256xf32>
      %c16_i32 = arith.constant 16 : i32
      %37 = vector.broadcast %c16_i32 : i32 to vector<128x256xi32>
      %38 = arith.cmpi eq, %21, %37 : vector<128x256xi32>
      %39 = vector.extract_strided_slice %18 {offsets = [0, 1], sizes = [128, 1], strides = [1, 1]} : vector<128x4xf32> to vector<128x1xf32>
      %cst_14 = arith.constant 0.000000e+00 : f32
      %40 = vector.shape_cast %39 : vector<128x1xf32> to vector<128x1xf32>
      %41 = vector.broadcast %40 : vector<128x1xf32> to vector<128x256xf32>
      %42 = vector.broadcast %cst_14 : f32 to vector<128x256xf32>
      %43 = arith.select %38, %41, %42 : vector<128x256xi1>, vector<128x256xf32>
      %44 = arith.addf %36, %43 : vector<128x256xf32>
      %c17_i32 = arith.constant 17 : i32
      %45 = vector.broadcast %c17_i32 : i32 to vector<128x256xi32>
      %46 = arith.cmpi eq, %21, %45 : vector<128x256xi32>
      %47 = vector.extract_strided_slice %18 {offsets = [0, 3], sizes = [128, 1], strides = [1, 1]} : vector<128x4xf32> to vector<128x1xf32>
      %cst_15 = arith.constant 0.000000e+00 : f32
      %48 = vector.shape_cast %47 : vector<128x1xf32> to vector<128x1xf32>
      %49 = vector.broadcast %48 : vector<128x1xf32> to vector<128x256xf32>
      %50 = vector.broadcast %cst_15 : f32 to vector<128x256xf32>
      %51 = arith.select %46, %49, %50 : vector<128x256xi1>, vector<128x256xf32>
      %52 = arith.addf %44, %51 : vector<128x256xf32>
      %c0_16 = arith.constant 0 : index
      %c0_17 = arith.constant 0 : index
      %c0_18 = arith.constant 0 : index
      %53 = vector.load %arg5[%c0_16, %c0_17, %c0_18] : memref<1x4x128xf32, #tpu.memory_space<vmem>>, vector<1x4x128xf32>
      %54 = vector.shape_cast %53 : vector<1x4x128xf32> to vector<4x128xf32>
      %cst_19 = arith.constant dense<0.000000e+00> : vector<4x256xf32>
      %55 = tpu.matmul %54, %52, %cst_19 {dimension_numbers = #tpu.dot_dimension_numbers<[1], [0], [0], [1], [0, 0, 1, 1], [], []>, precision = #tpu.contract_precision<fp32>} : vector<4x128xf32>, vector<128x256xf32>, vector<4x256xf32> -> vector<4x256xf32>
      %56 = arith.addf %14, %55 : vector<4x256xf32>
      %57 = vector.extract_strided_slice %56 {offsets = [0, 0], sizes = [3, 256], strides = [1, 1]} : vector<4x256xf32> to vector<3x256xf32>
      %58 = vector.extract_strided_slice %56 {offsets = [3, 0], sizes = [1, 256], strides = [1, 1]} : vector<4x256xf32> to vector<1x256xf32>
      %cst_20 = arith.constant 0.000000e+00 : f32
      %59 = vector.broadcast %cst_20 : f32 to vector<1x256xf32>
      %60 = arith.cmpf ogt, %58, %59 : vector<1x256xf32>
      %cst_21 = arith.constant 1.000000e+00 : f32
      %61 = vector.broadcast %cst_21 : f32 to vector<1x256xf32>
      %62 = arith.select %60, %58, %61 : vector<1x256xi1>, vector<1x256xf32>
      %63 = tpu.reciprocal %62 : vector<1x256xf32> -> vector<1x256xf32>
      %64 = vector.broadcast %63 : vector<1x256xf32> to vector<3x256xf32>
      %65 = arith.mulf %57, %64 : vector<3x256xf32>
      %66 = arith.extui %60 : vector<1x256xi1> to vector<1x256xi32>
      %67 = arith.sitofp %66 : vector<1x256xi32> to vector<1x256xf32>
      %cst_22 = arith.constant 7.500000e-01 : f32
      %68 = vector.broadcast %cst_22 : f32 to vector<1x256xf32>
      %69 = arith.mulf %68, %67 : vector<1x256xf32>
      %c0_23 = arith.constant 0 : index
      %c0_24 = arith.constant 0 : index
      %c0_25 = arith.constant 0 : index
      %70 = vector.load %arg6[%c0_23, %c0_24, %c0_25] : memref<1x3x256xf32, #tpu.memory_space<vmem>>, vector<1x3x256xf32>
      %71 = vector.shape_cast %70 : vector<1x3x256xf32> to vector<3x256xf32>
      %72 = arith.subf %65, %71 : vector<3x256xf32>
      %73 = vector.broadcast %69 : vector<1x256xf32> to vector<3x256xf32>
      %74 = arith.mulf %73, %72 : vector<3x256xf32>
      %75 = arith.addf %71, %74 : vector<3x256xf32>
      %c0_26 = arith.constant 0 : index
      %c0_27 = arith.constant 0 : index
      %c0_28 = arith.constant 0 : index
      %76 = vector.load %arg7[%c0_26, %c0_27, %c0_28] : memref<1x3x256xf32, #tpu.memory_space<vmem>>, vector<1x3x256xf32>
      %77 = vector.shape_cast %76 : vector<1x3x256xf32> to vector<3x256xf32>
      %78 = vector.shape_cast %75 : vector<3x256xf32> to vector<1x3x256xf32>
      tpu.vector_store %arg7[%c0_26, %c0_27, %c0_28], %78 {strides = array<i32>} : memref<1x3x256xf32, #tpu.memory_space<vmem>>, vector<1x3x256xf32>,
    } else {
    }
    return
  }
  func.func @transform_0(%arg0: i32, %arg1: i32, %arg2: memref<4xi32, #tpu.memory_space<smem>>) -> (i32, i32, i32, i32) {
    %c0_i32 = arith.constant 0 : i32
    %c0_i32_0 = arith.constant 0 : i32
    %c0_i32_1 = arith.constant 0 : i32
    %c0_i32_2 = arith.constant 0 : i32
    return %arg0, %c0_i32, %c0_i32_0, %c0_i32_1 : i32, i32, i32, i32
  }
  func.func @transform_1(%arg0: i32, %arg1: i32, %arg2: memref<4xi32, #tpu.memory_space<smem>>) -> (i32, i32, i32, i32) {
    %c0_i32 = arith.constant 0 : i32
    %c0_i32_0 = arith.constant 0 : i32
    %c0_i32_1 = arith.constant 0 : i32
    %c0_i32_2 = arith.constant 0 : i32
    return %arg0, %c0_i32, %c0_i32_0, %c0_i32_1 : i32, i32, i32, i32
  }
  func.func @transform_2(%arg0: i32, %arg1: i32, %arg2: memref<4xi32, #tpu.memory_space<smem>>) -> (i32, i32, i32) {
    %c0_i32 = arith.constant 0 : i32
    %c0_i32_0 = arith.constant 0 : i32
    %c0_i32_1 = arith.constant 0 : i32
    %c0_i32_2 = arith.constant 0 : i32
    return %c0_i32, %c0_i32_0, %c0_i32_1 : i32, i32, i32
  }
  func.func @transform_3(%arg0: i32, %arg1: i32, %arg2: memref<4xi32, #tpu.memory_space<smem>>) -> (i32, i32, i32) {
    %c0_i32 = arith.constant 0 : i32
    %c0_i32_0 = arith.constant 0 : i32
    return %arg0, %c0_i32, %arg1 : i32, i32, i32
  }
  func.func @transform_4(%arg0: i32, %arg1: i32, %arg2: memref<4xi32, #tpu.memory_space<smem>>) -> (i32, i32, i32) {
    %c0_i32 = arith.constant 0 : i32
    %c0_i32_0 = arith.constant 0 : i32
    return %arg0, %c0_i32, %arg1 : i32, i32, i32
  }
}

</mosaic_0001>

<llo_original>
// kernel: tpu_custom_call.1
$region0: #{tpu_custom_call.1}
  #allocation0 [shape = 'u32[]', space=smem, size = 0x4, offset = 0x4, fixed_abs, tag = 'smem constant byte address 0x4 - core index']
  #allocation1 [shape = 'u32[144,128]{1,0:T(1,128)}', space=vmem, size = 0x12000, scoped, tag = 'internal scratch']
  #allocation2 [shape = 's32[1]{0}', space=sflag, size = 0x4, scoped, tag = 'scoped memory for tpu_custom_call.1']
  #allocation3 [shape = 'u8[512]{0}', space=smem, size = 0x200, scoped, tag = 'prefetched SMEM operand 0']
  %s0 = inlined_call_operand.hbm [shape: s32[4], index: 0, kind: input, shape index: {}]
  %s1 = inlined_call_operand.hbm [shape: s32[4,1,128,1], index: 1, kind: input, shape index: {}]
  %s2 = inlined_call_operand.hbm [shape: f32[4,1,128,4], index: 2, kind: input, shape index: {}]
  %s3 = inlined_call_operand.hbm [shape: f32[1,4,128], index: 3, kind: input, shape index: {}]
  %s4 = inlined_call_operand.hbm [shape: f32[4,3,256], index: 4, kind: input, shape index: {}]
  %s5 = inlined_call_operand.hbm [shape: f32[4,3,256], index: 5, kind: output, shape index: {}]
  %s6 = sld [smem:[#allocation0]]
  $region73: #{tpu_custom_call.1} parent=0
    _
  %s8 = ssub.s32 1, %s6
  %s9 = scalar_select 0, %s8, %s6
  %11 = dma.hbm_to_smem %s0, 16, [#allocation3], [#allocation2]
  %12 = dma.done [#allocation2], 16
  %13 = sfence
  $region1: #{tpu_custom_call.1} parent=0
    #allocation4 [shape = 'u8[131072]{0}', space=vmem, size = 0x20000, scoped, tag = 'input window, operand 1']
    #allocation5 [shape = 's32[2]{0}', space=sflag, size = 0x8, scoped, tag = 'scoped memory for tpu_custom_call.1']
    #allocation6 [shape = 's32[2]{0}', space=sflag, size = 0x8, scoped, tag = 'scoped memory for tpu_custom_call.1']
    #allocation7 [shape = 'u8[131072]{0}', space=vmem, size = 0x20000, scoped, tag = 'input window, operand 2']
    #allocation8 [shape = 's32[2]{0}', space=sflag, size = 0x8, scoped, tag = 'scoped memory for tpu_custom_call.1']
    #allocation9 [shape = 'u8[2048]{0}', space=vmem, size = 0x800, scoped, tag = 'input window, operand 3, single buffered']
    #allocation10 [shape = 'u8[8192]{0}', space=vmem, size = 0x2000, scoped, tag = 'input window, operand 4']
    #allocation11 [shape = 's32[2]{0}', space=sflag, size = 0x8, scoped, tag = 'scoped memory for tpu_custom_call.1']
    #allocation12 [shape = 'u8[8192]{0}', space=vmem, size = 0x2000, scoped, tag = 'output window, operand 0']
    %14 = vsyncpa [#allocation5], 0
    %s15 = scalar_lea.sflag [#allocation5], 1
    %16 = vsyncpa %s15, 0
    %17 = vsyncpa [#allocation8], 0
    %s18 = scalar_lea.sflag [#allocation8], 1
    %19 = vsyncpa %s18, 0
    %20 = vsyncpa [#allocation11], 0
    %s21 = scalar_lea.sflag [#allocation11], 1
    %22 = vsyncpa %s21, 0
    %23 = vsyncpa [#allocation6], 0
    %s24 = scalar_lea.sflag [#allocation6], 1
    %25 = vsyncpa %s24, 0
    loop: start=0, step=1, limit=6
    $region2: #{tpu_custom_call.1} parent=1 // loop_pre_header
      _
    $region3: #{tpu_custom_call.1} parent=1 // loop_header
      %s27 = sphi 0, %s31
      %p28 = scmp.ge.s32.totalorder %s27, 6
      %s34 = sphi 0, %s46
      %s35 = sphi 0, %s42
      %s36 = sphi 0, %s34
      %s37 = sphi 0, %s35
      %s38 = sphi 0, %s36
      %s39 = sphi 0, %s37
      %s49 = sphi 0, %s51
      %s52 = sphi 0, %s49
      %s53 = sphi 0, %s52
      %s69 = sphi 0, %s53
      %s75 = sphi 0, %s77
      %s78 = sphi 0, %s75
      %s79 = sphi 0, %s78
      %s95 = sphi 0, %s79
      %s99 = sphi 0, %s99
      %s101 = sphi 0, %s99
      %s102 = sphi 0, %s101
      %s116 = sphi 0, %s102
      %s124 = sphi 0, %s126
      %s127 = sphi 0, %s124
      %s128 = sphi 0, %s127
      %s144 = sphi 0, %s128
      %s152 = sphi 0, %s154
      %s155 = sphi 0, %s152
      %s156 = sphi 0, %s155
      %s172 = sphi 0, %s156
    $region4: #{tpu_custom_call.1} parent=1 // loop_header_branch
      %30 = sbr.rel (%p28) target = $region8
    $region5: #{tpu_custom_call.1} parent=1 // loop_body
      %s32 = ssub.s32 %s27, 1
      %s33 = ssub.s32 %s27, 2
      %s40 = sadd.s32 1, %s35
      %p41 = scmp.ge.s32.totalorder %s40, 1
      %s42 = scalar_select %p41, 0, %s40
      %s43 = sadd.s32 1, %s34
      %s44 = scalar_select %p41, %s43, %s34
      %p45 = scmp.ge.s32.totalorder %s44, 4
      %s46 = scalar_select %p45, 0, %s44
      %s47 = ssub.s32 %s34, %s46
      %p48 = scmp.eq.s32.totalorder %s47, 0
      %s50 = sadd.s32 %s49, 1
      %s51 = scalar_select %p48, %s49, %s50
      %p54 = pneg %p48
      %p55 = scmp.eq.s32.totalorder %s27, 3
      %p56 = por %p54, %p55
      %p57 = scmp.ne.s32.totalorder %s49, %s52
      %p58 = scmp.eq.s32.totalorder %s27, 0
      %p59 = por %p57, %p58
      %p60 = scmp.ne.s32.totalorder %s49, %s52
      %p61 = scmp.eq.s32.totalorder %s32, 3
      %p62 = por %p60, %p61
      %p63 = scmp.ne.s32.totalorder %s52, %s53
      %p64 = scmp.eq.s32.totalorder %s32, 0
      %p65 = por %p63, %p64
      %p66 = scmp.ne.s32.totalorder %s52, %s53
      %p67 = scmp.eq.s32.totalorder %s33, 3
      %p68 = por %p66, %p67
      %p70 = scmp.ne.s32.totalorder %s53, %s69
      %p71 = scmp.eq.s32.totalorder %s33, 0
      %p72 = por %p70, %p71
      %s73 = ssub.s32 %s34, %s46
      %p74 = scmp.eq.s32.totalorder %s73, 0
      %s76 = sadd.s32 %s75, 1
      %s77 = scalar_select %p74, %s75, %s76
      %p80 = pneg %p74
      %p81 = scmp.eq.s32.totalorder %s27, 3
      %p82 = por %p80, %p81
      %p83 = scmp.ne.s32.totalorder %s75, %s78
      %p84 = scmp.eq.s32.totalorder %s27, 0
      %p85 = por %p83, %p84
      %p86 = scmp.ne.s32.totalorder %s75, %s78
      %p87 = scmp.eq.s32.totalorder %s32, 3
      %p88 = por %p86, %p87
      %p89 = scmp.ne.s32.totalorder %s78, %s79
      %p90 = scmp.eq.s32.totalorder %s32, 0
      %p91 = por %p89, %p90
      %p92 = scmp.ne.s32.totalorder %s78, %s79
      %p93 = scmp.eq.s32.totalorder %s33, 3
      %p94 = por %p92, %p93
      %p96 = scmp.ne.s32.totalorder %s79, %s95
      %p97 = scmp.eq.s32.totalorder %s33, 0
      %p98 = por %p96, %p97
      %s100 = sadd.s32 %s99, 1
      %p103 = scmp.eq.s32.totalorder %s27, 3
      %p104 = scmp.ne.s32.totalorder %s99, %s101
      %p105 = scmp.eq.s32.totalorder %s27, 0
      %p106 = por %p104, %p105
      %p107 = scmp.ne.s32.totalorder %s99, %s101
      %p108 = scmp.eq.s32.totalorder %s32, 3
      %p109 = por %p107, %p108
      %p110 = scmp.ne.s32.totalorder %s101, %s102
      %p111 = scmp.eq.s32.totalorder %s32, 0
      %p112 = por %p110, %p111
      %p113 = scmp.ne.s32.totalorder %s101, %s102
      %p114 = scmp.eq.s32.totalorder %s33, 3
      %p115 = por %p113, %p114
      %p117 = scmp.ne.s32.totalorder %s102, %s116
      %p118 = scmp.eq.s32.totalorder %s33, 0
      %p119 = por %p117, %p118
      %s120 = ssub.s32 %s34, %s46
      %s121 = ssub.s32 %s35, %s42
      %s122 = sor.u32 %s120, %s121
      %p123 = scmp.eq.s32.totalorder %s122, 0
      %s125 = sadd.s32 %s124, 1
      %s126 = scalar_select %p123, %s124, %s125
      %p129 = pneg %p123
      %p130 = scmp.eq.s32.totalorder %s27, 3
      %p131 = por %p129, %p130
      %p132 = scmp.ne.s32.totalorder %s124, %s127
      %p133 = scmp.eq.s32.totalorder %s27, 0
      %p134 = por %p132, %p133
      %p135 = scmp.ne.s32.totalorder %s124, %s127
      %p136 = scmp.eq.s32.totalorder %s32, 3
      %p137 = por %p135, %p136
      %p138 = scmp.ne.s32.totalorder %s127, %s128
      %p139 = scmp.eq.s32.totalorder %s32, 0
      %p140 = por %p138, %p139
      %p141 = scmp.ne.s32.totalorder %s127, %s128
      %p142 = scmp.eq.s32.totalorder %s33, 3
      %p143 = por %p141, %p142
      %p145 = scmp.ne.s32.totalorder %s128, %s144
      %p146 = scmp.eq.s32.totalorder %s33, 0
      %p147 = por %p145, %p146
      %s148 = ssub.s32 %s34, %s46
      %s149 = ssub.s32 %s35, %s42
      %s150 = sor.u32 %s148, %s149
      %p151 = scmp.eq.s32.totalorder %s150, 0
      %s153 = sadd.s32 %s152, 1
      %s154 = scalar_select %p151, %s152, %s153
      %p157 = pneg %p151
      %p158 = scmp.eq.s32.totalorder %s27, 3
      %p159 = por %p157, %p158
      %p160 = scmp.ne.s32.totalorder %s152, %s155
      %p161 = scmp.eq.s32.totalorder %s27, 0
      %p162 = por %p160, %p161
      %p163 = scmp.ne.s32.totalorder %s152, %s155
      %p164 = scmp.eq.s32.totalorder %s32, 3
      %p165 = por %p163, %p164
      %p166 = scmp.ne.s32.totalorder %s155, %s156
      %p167 = scmp.eq.s32.totalorder %s32, 0
      %p168 = por %p166, %p167
      %p169 = scmp.ne.s32.totalorder %s155, %s156
      %p170 = scmp.eq.s32.totalorder %s33, 3
      %p171 = por %p169, %p170
      %p173 = scmp.ne.s32.totalorder %s156, %s172
      %p174 = scmp.eq.s32.totalorder %s33, 0
      %p175 = por %p173, %p174
      %p176 = scmp.le.s32.totalorder 1, %s27
      %p177 = scmp.lt.s32.totalorder %s27, 5
      %p178 = pnand %p176, %p177
      %p179 = pneg %p178
      // Predicated region
      $region9: #{tpu_custom_call.1} parent=5 // pred_check
        _
      $region10: #{tpu_custom_call.1} parent=5 // pred_check_branch
        %181 = sbr.rel (%p178) target = $region12
      $region11: #{tpu_custom_call.1} parent=5 // pred_region
        %s182 = ssub.s32 %s27, 1
        // Predicated region
        $region13: #{tpu_custom_call.1} parent=11 // pred_check
          %p183 = pneg %p112
        $region14: #{tpu_custom_call.1} parent=11 // pred_check_branch
          %185 = sbr.rel (%p183) target = $region16
        $region15: #{tpu_custom_call.1} parent=11 // pred_region
          %s187 = ssub.s32 64, 64
          %188 = vsyncadd [#allocation8], %s187
          %s190 = sshll.u32 [#allocation9], 4
          %s191 = int_to_ptr.vmem [resolvable:$true] %s190
          %193 = dma.hbm_to_vmem [thread:$0]  %s3, 64, %s191, [#allocation8]
        $region16: #{tpu_custom_call.1} parent=11 // pred_fallthru
          _
      $region12: #{tpu_custom_call.1} parent=5 // pred_fallthru
        _
      %p194 = scmp.lt.s32.totalorder %s27, 4
      // Predicated region
      $region17: #{tpu_custom_call.1} parent=5 // pred_check
        %p195 = pneg %p194
      $region18: #{tpu_custom_call.1} parent=5 // pred_check_branch
        %197 = sbr.rel (%p195) target = $region20
      $region19: #{tpu_custom_call.1} parent=5 // pred_region
        // Predicated region
        $region21: #{tpu_custom_call.1} parent=19 // pred_check
          %p198 = pneg %p59
        $region22: #{tpu_custom_call.1} parent=19 // pred_check_branch
          %200 = sbr.rel (%p198) target = $region24
        $region23: #{tpu_custom_call.1} parent=19 // pred_region
          %s201 = sand.u32 %s49, 1
          %s202 = scalar_lea.sflag [#allocation5], %s201
          %s203 = sand.u32 %s49, 1
          %s204 = smul.addr %s203, 128
          %s205 = scalar_lea.vmem [#allocation4], %s204
          %s207 = ssub.s32 2048, 2048
          %208 = vsyncadd %s202, %s207
          %s209 = smul.addr %s34, 16
          %s210 = smul.addr %s209, 128
          %s211 = scalar_lea.hbm %s1, %s210
          %s212 = sshll.u32 %s205, 4
          %s213 = int_to_ptr.vmem [resolvable:$true] %s212
          %218 = dma.hbm_to_vmem [thread:$0]  %s211, 2048, %s213, %s202, 128, 128, 8
        $region24: #{tpu_custom_call.1} parent=19 // pred_fallthru
          _
        // Predicated region
        $region25: #{tpu_custom_call.1} parent=19 // pred_check
          %p219 = pneg %p85
        $region26: #{tpu_custom_call.1} parent=19 // pred_check_branch
          %221 = sbr.rel (%p219) target = $region28
        $region27: #{tpu_custom_call.1} parent=19 // pred_region
          %s222 = sand.u32 %s27, 1
          %s223 = scalar_lea.sflag [#allocation8], %s222
          %s224 = sand.u32 %s75, 1
          %s225 = smul.addr %s224, 128
          %s226 = scalar_lea.vmem [#allocation7], %s225
          %s228 = ssub.s32 2048, 2048
          %229 = vsyncadd %s223, %s228
          %s230 = smul.addr %s34, 16
          %s231 = smul.addr %s230, 128
          %s232 = scalar_lea.hbm %s2, %s231
          %s233 = sshll.u32 %s226, 4
          %s234 = int_to_ptr.vmem [resolvable:$true] %s233
          %239 = dma.hbm_to_vmem [thread:$0]  %s232, 2048, %s234, %s223, 128, 128, 8
        $region28: #{tpu_custom_call.1} parent=19 // pred_fallthru
          _
        // Predicated region
        $region29: #{tpu_custom_call.1} parent=19 // pred_check
          %p240 = pneg %p134
        $region30: #{tpu_custom_call.1} parent=19 // pred_check_branch
          %242 = sbr.rel (%p240) target = $region32
        $region31: #{tpu_custom_call.1} parent=19 // pred_region
          %s243 = sand.u32 %s124, 1
          %s244 = scalar_lea.sflag [#allocation11], %s243
          %s245 = sand.u32 %s124, 1
          %s246 = smul.addr %s245, 8
          %s247 = scalar_lea.vmem [#allocation10], %s246
          %s248 = smul.u32 2, %s35
          %s250 = ssub.s32 128, 128
          %251 = vsyncadd %s244, %s250
          %s252 = smul.addr %s34, 2
          %s253 = sadd.s32 %s248, %s252
          %s254 = smul.addr %s253, 64
          %s255 = scalar_lea.hbm %s4, %s254
          %s257 = sshll.u32 %s247, 4
          %s258 = int_to_ptr.vmem [resolvable:$true] %s257
          %260 = dma.hbm_to_vmem [thread:$0]  %s255, 128, %s258, %s244
        $region32: #{tpu_custom_call.1} parent=19 // pred_fallthru
          _
      $region20: #{tpu_custom_call.1} parent=5 // pred_fallthru
        _
      %p261 = scmp.le.s32.totalorder 1, %s27
      %p262 = scmp.lt.s32.totalorder %s27, 5
      %p263 = pnand %p261, %p262
      %p264 = pneg %p263
      // Predicated region
      $region33: #{tpu_custom_call.1} parent=5 // pred_check
        _
      $region34: #{tpu_custom_call.1} parent=5 // pred_check_branch
        %266 = sbr.rel (%p263) target = $region36
      $region35: #{tpu_custom_call.1} parent=5 // pred_region
        %s267 = ssub.s32 %s27, 1
        %s268 = sand.u32 %s52, 1
        %s269 = scalar_lea.sflag [#allocation5], %s268
        %s270 = sand.u32 %s52, 1
        %s271 = smul.addr %s270, 128
        %s272 = scalar_lea.vmem [#allocation4], %s271
        // Predicated region
        $region37: #{tpu_custom_call.1} parent=35 // pred_check
          %p273 = pneg %p65
        $region38: #{tpu_custom_call.1} parent=35 // pred_check_branch
          %275 = sbr.rel (%p273) target = $region40
        $region39: #{tpu_custom_call.1} parent=35 // pred_region
          %276 = dma.done %s269, 2048
        $region40: #{tpu_custom_call.1} parent=35 // pred_fallthru
          _
        %s277 = sand.u32 %s32, 1
        %s278 = scalar_lea.sflag [#allocation8], %s277
        %s279 = sand.u32 %s78, 1
        %s280 = smul.addr %s279, 128
        %s281 = scalar_lea.vmem [#allocation7], %s280
        // Predicated region
        $region41: #{tpu_custom_call.1} parent=35 // pred_check
          %p282 = pneg %p91
        $region42: #{tpu_custom_call.1} parent=35 // pred_check_branch
          %284 = sbr.rel (%p282) target = $region44
        $region43: #{tpu_custom_call.1} parent=35 // pred_region
          %285 = dma.done %s278, 2048
        $region44: #{tpu_custom_call.1} parent=35 // pred_fallthru
          _
        // Predicated region
        $region45: #{tpu_custom_call.1} parent=35 // pred_check
          %p286 = pneg %p112
        $region46: #{tpu_custom_call.1} parent=35 // pred_check_branch
          %288 = sbr.rel (%p286) target = $region48
        $region47: #{tpu_custom_call.1} parent=35 // pred_region
          %289 = dma.done [#allocation8], 64
        $region48: #{tpu_custom_call.1} parent=35 // pred_fallthru
          _
        %s290 = sand.u32 %s127, 1
        %s291 = scalar_lea.sflag [#allocation11], %s290
        %s292 = sand.u32 %s127, 1
        %s293 = smul.addr %s292, 8
        %s294 = scalar_lea.vmem [#allocation10], %s293
        // Predicated region
        $region49: #{tpu_custom_call.1} parent=35 // pred_check
          %p295 = pneg %p140
        $region50: #{tpu_custom_call.1} parent=35 // pred_check_branch
          %297 = sbr.rel (%p295) target = $region52
        $region51: #{tpu_custom_call.1} parent=35 // pred_region
          %298 = dma.done %s291, 128
        $region52: #{tpu_custom_call.1} parent=35 // pred_fallthru
          _
        %s299 = sand.u32 %s52, 1
        %s300 = scalar_lea.sflag [#allocation5], %s299
        %s301 = sand.u32 %s52, 1
        %s302 = smul.addr %s301, 128
        %s303 = scalar_lea.vmem [#allocation4], %s302
        %p304 = pneg %p65
        %p305 = pneg %p62
        %s306 = sand.u32 %s32, 1
        %s307 = scalar_lea.sflag [#allocation8], %s306
        %s308 = sand.u32 %s78, 1
        %s309 = smul.addr %s308, 128
        %s310 = scalar_lea.vmem [#allocation7], %s309
        %p311 = pneg %p91
        %p312 = pneg %p88
        %p313 = pneg %p112
        %p314 = pneg %p109
        %s315 = sand.u32 %s127, 1
        %s316 = scalar_lea.sflag [#allocation11], %s315
        %s317 = sand.u32 %s127, 1
        %s318 = smul.addr %s317, 8
        %s319 = scalar_lea.vmem [#allocation10], %s318
        %p320 = pneg %p140
        %p321 = pneg %p137
        %p322 = pneg %p168
        %p323 = pneg %p165
        %s324 = sand.u32 %s155, 1
        %s325 = scalar_lea.sflag [#allocation6], %s324
        %s326 = sand.u32 %s155, 1
        %s327 = smul.addr %s326, 8
        %s328 = scalar_lea.vmem [#allocation12], %s327
        %s329 = smul.u32 2, %s37
        %s330 = smul.u32 2, %s37
        %s331 = sadd.s32 %s36, %s37
        %s332 = sld [smem:[#allocation3 + %s331]]
        %p333 = scmp.eq.s32.totalorder %s332, 0
        // Predicated region
        $region53: #{tpu_custom_call.1} parent=35 // pred_check
          %p334 = pneg %p333
        $region54: #{tpu_custom_call.1} parent=35 // pred_check_branch
          %336 = sbr.rel (%p334) target = $region56
        $region55: #{tpu_custom_call.1} parent=35 // pred_region
          %v337 = vld [vmem:[%s294] sm:$0x77]
          %338 = vst [vmem:[%s328] sm:$0x77] %v337
        $region56: #{tpu_custom_call.1} parent=35 // pred_fallthru
          _
        %p339 = scmp.gt.s32.totalorder %s332, 0
        // Predicated region
        $region57: #{tpu_custom_call.1} parent=35 // pred_check
          %p340 = pneg %p339
        $region58: #{tpu_custom_call.1} parent=35 // pred_check_branch
          %342 = sbr.rel (%p340) target = $region60
        $region59: #{tpu_custom_call.1} parent=35 // pred_region
          %s343 = smul.u32 %s37, 256
          %v344 = vlaneseq
          %v345 = vand.u32 %v344, 127
          %v346 = vadd.s32 %v345, 128
          %v347 = vstv %s343
          %v348 = vadd.s32 %v347, %v345
          %v349 = vadd.s32 %v347, %v346
          %v350 = vld [vmem:[%s272] sm:$0xff]
          %v351 = vld [vmem:[%s272 + $0x8] sm:$0xff]
          %v352 = vld [vmem:[%s272 + $0x10] sm:$0xff]
          %v353 = vld [vmem:[%s272 + $0x18] sm:$0xff]
          %v354 = vld [vmem:[%s272 + $0x20] sm:$0xff]
          %v355 = vld [vmem:[%s272 + $0x28] sm:$0xff]
          %v356 = vld [vmem:[%s272 + $0x30] sm:$0xff]
          %v357 = vld [vmem:[%s272 + $0x38] sm:$0xff]
          %v358 = vld [vmem:[%s272 + $0x40] sm:$0xff]
          %v359 = vld [vmem:[%s272 + $0x48] sm:$0xff]
          %v360 = vld [vmem:[%s272 + $0x50] sm:$0xff]
          %v361 = vld [vmem:[%s272 + $0x58] sm:$0xff]
          %v362 = vld [vmem:[%s272 + $0x60] sm:$0xff]
          %v363 = vld [vmem:[%s272 + $0x68] sm:$0xff]
          %v364 = vld [vmem:[%s272 + $0x70] sm:$0xff]
          %v365 = vld [vmem:[%s272 + $0x78] sm:$0xff]
          %v366 = vld [vmem:[%s281] sm:$0xff]
          %v367 = vld [vmem:[%s281 + $0x8] sm:$0xff]
          %v368 = vld [vmem:[%s281 + $0x10] sm:$0xff]
          %v369 = vld [vmem:[%s281 + $0x18] sm:$0xff]
          %v370 = vld [vmem:[%s281 + $0x20] sm:$0xff]
          %v371 = vld [vmem:[%s281 + $0x28] sm:$0xff]
          %v372 = vld [vmem:[%s281 + $0x30] sm:$0xff]
          %v373 = vld [vmem:[%s281 + $0x38] sm:$0xff]
          %v374 = vld [vmem:[%s281 + $0x40] sm:$0xff]
          %v375 = vld [vmem:[%s281 + $0x48] sm:$0xff]
          %v376 = vld [vmem:[%s281 + $0x50] sm:$0xff]
          %v377 = vld [vmem:[%s281 + $0x58] sm:$0xff]
          %v378 = vld [vmem:[%s281 + $0x60] sm:$0xff]
          %v379 = vld [vmem:[%s281 + $0x68] sm:$0xff]
          %v380 = vld [vmem:[%s281 + $0x70] sm:$0xff]
          %v381 = vld [vmem:[%s281 + $0x78] sm:$0xff]
          %382 = vset.pattern.permute.xlu0 0
          %383 = vperm.xlu0 %382, %v350
          %v384 = vpop.permute.xlu0 %383
          %385 = vset.pattern.permute.xlu0 0
          %386 = vperm.xlu0 %385, %v351
          %v387 = vpop.permute.xlu0 %386
          %388 = vset.pattern.permute.xlu0 0
          %389 = vperm.xlu0 %388, %v352
          %v390 = vpop.permute.xlu0 %389
          %391 = vset.pattern.permute.xlu0 0
          %392 = vperm.xlu0 %391, %v353
          %v393 = vpop.permute.xlu0 %392
          %394 = vset.pattern.permute.xlu0 0
          %395 = vperm.xlu0 %394, %v354
          %v396 = vpop.permute.xlu0 %395
          %397 = vset.pattern.permute.xlu0 0
          %398 = vperm.xlu0 %397, %v355
          %v399 = vpop.permute.xlu0 %398
          %400 = vset.pattern.permute.xlu0 0
          %401 = vperm.xlu0 %400, %v356
          %v402 = vpop.permute.xlu0 %401
          %403 = vset.pattern.permute.xlu0 0
          %404 = vperm.xlu0 %403, %v357
          %v405 = vpop.permute.xlu0 %404
          %406 = vset.pattern.permute.xlu0 0
          %407 = vperm.xlu0 %406, %v358
          %v408 = vpop.permute.xlu0 %407
          %409 = vset.pattern.permute.xlu0 0
          %410 = vperm.xlu0 %409, %v359
          %v411 = vpop.permute.xlu0 %410
          %412 = vset.pattern.permute.xlu0 0
          %413 = vperm.xlu0 %412, %v360
          %v414 = vpop.permute.xlu0 %413
          %415 = vset.pattern.permute.xlu0 0
          %416 = vperm.xlu0 %415, %v361
          %v417 = vpop.permute.xlu0 %416
          %418 = vset.pattern.permute.xlu0 0
          %419 = vperm.xlu0 %418, %v362
          %v420 = vpop.permute.xlu0 %419
          %421 = vset.pattern.permute.xlu0 0
          %422 = vperm.xlu0 %421, %v363
          %v423 = vpop.permute.xlu0 %422
          %424 = vset.pattern.permute.xlu0 0
          %425 = vperm.xlu0 %424, %v364
          %v426 = vpop.permute.xlu0 %425
          %427 = vset.pattern.permute.xlu0 0
          %428 = vperm.xlu0 %427, %v365
          %v429 = vpop.permute.xlu0 %428
          %v430 = vsub.s32 %v348, %v384
          %v431 = vsub.s32 %v349, %v384
          %v432 = vsub.s32 %v348, %v387
          %v433 = vsub.s32 %v349, %v387
          %v434 = vsub.s32 %v348, %v390
          %v435 = vsub.s32 %v349, %v390
          %v436 = vsub.s32 %v348, %v393
          %v437 = vsub.s32 %v349, %v393
          %v438 = vsub.s32 %v348, %v396
          %v439 = vsub.s32 %v349, %v396
          %v440 = vsub.s32 %v348, %v399
          %v441 = vsub.s32 %v349, %v399
          %v442 = vsub.s32 %v348, %v402
          %v443 = vsub.s32 %v349, %v402
          %v444 = vsub.s32 %v348, %v405
          %v445 = vsub.s32 %v349, %v405
          %v446 = vsub.s32 %v348, %v408
          %v447 = vsub.s32 %v349, %v408
          %v448 = vsub.s32 %v348, %v411
          %v449 = vsub.s32 %v349, %v411
          %v450 = vsub.s32 %v348, %v414
          %v451 = vsub.s32 %v349, %v414
          %v452 = vsub.s32 %v348, %v417
          %v453 = vsub.s32 %v349, %v417
          %v454 = vsub.s32 %v348, %v420
          %v455 = vsub.s32 %v349, %v420
          %v456 = vsub.s32 %v348, %v423
          %v457 = vsub.s32 %v349, %v423
          %v458 = vsub.s32 %v348, %v426
          %v459 = vsub.s32 %v349, %v426
          %v460 = vsub.s32 %v348, %v429
          %v461 = vsub.s32 %v349, %v429
          %vm462 = vcmp.eq.s32.totalorder %v430, 0
          %vm463 = vcmp.eq.s32.totalorder %v431, 0
          %vm464 = vcmp.eq.s32.totalorder %v432, 0
          %vm465 = vcmp.eq.s32.totalorder %v433, 0
          %vm466 = vcmp.eq.s32.totalorder %v434, 0
          %vm467 = vcmp.eq.s32.totalorder %v435, 0
          %vm468 = vcmp.eq.s32.totalorder %v436, 0
          %vm469 = vcmp.eq.s32.totalorder %v437, 0
          %vm470 = vcmp.eq.s32.totalorder %v438, 0
          %vm471 = vcmp.eq.s32.totalorder %v439, 0
          %vm472 = vcmp.eq.s32.totalorder %v440, 0
          %vm473 = vcmp.eq.s32.totalorder %v441, 0
          %vm474 = vcmp.eq.s32.totalorder %v442, 0
          %vm475 = vcmp.eq.s32.totalorder %v443, 0
          %vm476 = vcmp.eq.s32.totalorder %v444, 0
          %vm477 = vcmp.eq.s32.totalorder %v445, 0
          %vm478 = vcmp.eq.s32.totalorder %v446, 0
          %vm479 = vcmp.eq.s32.totalorder %v447, 0
          %vm480 = vcmp.eq.s32.totalorder %v448, 0
          %vm481 = vcmp.eq.s32.totalorder %v449, 0
          %vm482 = vcmp.eq.s32.totalorder %v450, 0
          %vm483 = vcmp.eq.s32.totalorder %v451, 0
          %vm484 = vcmp.eq.s32.totalorder %v452, 0
          %vm485 = vcmp.eq.s32.totalorder %v453, 0
          %vm486 = vcmp.eq.s32.totalorder %v454, 0
          %vm487 = vcmp.eq.s32.totalorder %v455, 0
          %vm488 = vcmp.eq.s32.totalorder %v456, 0
          %vm489 = vcmp.eq.s32.totalorder %v457, 0
          %vm490 = vcmp.eq.s32.totalorder %v458, 0
          %vm491 = vcmp.eq.s32.totalorder %v459, 0
          %vm492 = vcmp.eq.s32.totalorder %v460, 0
          %vm493 = vcmp.eq.s32.totalorder %v461, 0
          %495 = vset.pattern.permute.xlu0 0
          %496 = vperm.xlu0 %495, %v366
          %v497 = vpop.permute.xlu0 %496
          %500 = vset.pattern.permute.xlu0 0
          %501 = vperm.xlu0 %500, %v367
          %v502 = vpop.permute.xlu0 %501
          %505 = vset.pattern.permute.xlu0 0
          %506 = vperm.xlu0 %505, %v368
          %v507 = vpop.permute.xlu0 %506
          %510 = vset.pattern.permute.xlu0 0
          %511 = vperm.xlu0 %510, %v369
          %v512 = vpop.permute.xlu0 %511
          %515 = vset.pattern.permute.xlu0 0
          %516 = vperm.xlu0 %515, %v370
          %v517 = vpop.permute.xlu0 %516
          %520 = vset.pattern.permute.xlu0 0
          %521 = vperm.xlu0 %520, %v371
          %v522 = vpop.permute.xlu0 %521
          %525 = vset.pattern.permute.xlu0 0
          %526 = vperm.xlu0 %525, %v372
          %v527 = vpop.permute.xlu0 %526
          %530 = vset.pattern.permute.xlu0 0
          %531 = vperm.xlu0 %530, %v373
          %v532 = vpop.permute.xlu0 %531
          %535 = vset.pattern.permute.xlu0 0
          %536 = vperm.xlu0 %535, %v374
          %v537 = vpop.permute.xlu0 %536
          %540 = vset.pattern.permute.xlu0 0
          %541 = vperm.xlu0 %540, %v375
          %v542 = vpop.permute.xlu0 %541
          %545 = vset.pattern.permute.xlu0 0
          %546 = vperm.xlu0 %545, %v376
          %v547 = vpop.permute.xlu0 %546
          %550 = vset.pattern.permute.xlu0 0
          %551 = vperm.xlu0 %550, %v377
          %v552 = vpop.permute.xlu0 %551
          %555 = vset.pattern.permute.xlu0 0
          %556 = vperm.xlu0 %555, %v378
          %v557 = vpop.permute.xlu0 %556
          %560 = vset.pattern.permute.xlu0 0
          %561 = vperm.xlu0 %560, %v379
          %v562 = vpop.permute.xlu0 %561
          %565 = vset.pattern.permute.xlu0 0
          %566 = vperm.xlu0 %565, %v380
          %v567 = vpop.permute.xlu0 %566
          %570 = vset.pattern.permute.xlu0 0
          %571 = vperm.xlu0 %570, %v381
          %v572 = vpop.permute.xlu0 %571
          %v574 = vsel %vm462, %v497, 0.0
          %v575 = vsel %vm463, %v497, 0.0
          %v576 = vsel %vm464, %v502, 0.0
          %v577 = vsel %vm465, %v502, 0.0
          %v578 = vsel %vm466, %v507, 0.0
          %v579 = vsel %vm467, %v507, 0.0
          %v580 = vsel %vm468, %v512, 0.0
          %v581 = vsel %vm469, %v512, 0.0
          %v582 = vsel %vm470, %v517, 0.0
          %v583 = vsel %vm471, %v517, 0.0
          %v584 = vsel %vm472, %v522, 0.0
          %v585 = vsel %vm473, %v522, 0.0
          %v586 = vsel %vm474, %v527, 0.0
          %v587 = vsel %vm475, %v527, 0.0
          %v588 = vsel %vm476, %v532, 0.0
          %v589 = vsel %vm477, %v532, 0.0
          %v590 = vsel %vm478, %v537, 0.0
          %v591 = vsel %vm479, %v537, 0.0
          %v592 = vsel %vm480, %v542, 0.0
          %v593 = vsel %vm481, %v542, 0.0
          %v594 = vsel %vm482, %v547, 0.0
          %v595 = vsel %vm483, %v547, 0.0
          %v596 = vsel %vm484, %v552, 0.0
          %v597 = vsel %vm485, %v552, 0.0
          %v598 = vsel %vm486, %v557, 0.0
          %v599 = vsel %vm487, %v557, 0.0
          %v600 = vsel %vm488, %v562, 0.0
          %v601 = vsel %vm489, %v562, 0.0
          %v602 = vsel %vm490, %v567, 0.0
          %v603 = vsel %vm491, %v567, 0.0
          %v604 = vsel %vm492, %v572, 0.0
          %v605 = vsel %vm493, %v572, 0.0
          %vm606 = vcmp.eq.s32.totalorder %v430, 1
          %vm607 = vcmp.eq.s32.totalorder %v431, 1
          %vm608 = vcmp.eq.s32.totalorder %v432, 1
          %vm609 = vcmp.eq.s32.totalorder %v433, 1
          %vm610 = vcmp.eq.s32.totalorder %v434, 1
          %vm611 = vcmp.eq.s32.totalorder %v435, 1
          %vm612 = vcmp.eq.s32.totalorder %v436, 1
          %vm613 = vcmp.eq.s32.totalorder %v437, 1
          %vm614 = vcmp.eq.s32.totalorder %v438, 1
          %vm615 = vcmp.eq.s32.totalorder %v439, 1
          %vm616 = vcmp.eq.s32.totalorder %v440, 1
          %vm617 = vcmp.eq.s32.totalorder %v441, 1
          %vm618 = vcmp.eq.s32.totalorder %v442, 1
          %vm619 = vcmp.eq.s32.totalorder %v443, 1
          %vm620 = vcmp.eq.s32.totalorder %v444, 1
          %vm621 = vcmp.eq.s32.totalorder %v445, 1
          %vm622 = vcmp.eq.s32.totalorder %v446, 1
          %vm623 = vcmp.eq.s32.totalorder %v447, 1
          %vm624 = vcmp.eq.s32.totalorder %v448, 1
          %vm625 = vcmp.eq.s32.totalorder %v449, 1
          %vm626 = vcmp.eq.s32.totalorder %v450, 1
          %vm627 = vcmp.eq.s32.totalorder %v451, 1
          %vm628 = vcmp.eq.s32.totalorder %v452, 1
          %vm629 = vcmp.eq.s32.totalorder %v453, 1
          %vm630 = vcmp.eq.s32.totalorder %v454, 1
          %vm631 = vcmp.eq.s32.totalorder %v455, 1
          %vm632 = vcmp.eq.s32.totalorder %v456, 1
          %vm633 = vcmp.eq.s32.totalorder %v457, 1
          %vm634 = vcmp.eq.s32.totalorder %v458, 1
          %vm635 = vcmp.eq.s32.totalorder %v459, 1
          %vm636 = vcmp.eq.s32.totalorder %v460, 1
          %vm637 = vcmp.eq.s32.totalorder %v461, 1
          %638 = vset.pattern.permute.xlu0 2
          %639 = vperm.xlu0 %638, %v366
          %v640 = vpop.permute.xlu0 %639
          %642 = vset.pattern.permute.xlu0 2
          %643 = vperm.xlu0 %642, %v367
          %v644 = vpop.permute.xlu0 %643
          %646 = vset.pattern.permute.xlu0 2
          %647 = vperm.xlu0 %646, %v368
          %v648 = vpop.permute.xlu0 %647
          %650 = vset.pattern.permute.xlu0 2
          %651 = vperm.xlu0 %650, %v369
          %v652 = vpop.permute.xlu0 %651
          %654 = vset.pattern.permute.xlu0 2
          %655 = vperm.xlu0 %654, %v370
          %v656 = vpop.permute.xlu0 %655
          %658 = vset.pattern.permute.xlu0 2
          %659 = vperm.xlu0 %658, %v371
          %v660 = vpop.permute.xlu0 %659
          %662 = vset.pattern.permute.xlu0 2
          %663 = vperm.xlu0 %662, %v372
          %v664 = vpop.permute.xlu0 %663
          %666 = vset.pattern.permute.xlu0 2
          %667 = vperm.xlu0 %666, %v373
          %v668 = vpop.permute.xlu0 %667
          %670 = vset.pattern.permute.xlu0 2
          %671 = vperm.xlu0 %670, %v374
          %v672 = vpop.permute.xlu0 %671
          %674 = vset.pattern.permute.xlu0 2
          %675 = vperm.xlu0 %674, %v375
          %v676 = vpop.permute.xlu0 %675
          %678 = vset.pattern.permute.xlu0 2
          %679 = vperm.xlu0 %678, %v376
          %v680 = vpop.permute.xlu0 %679
          %682 = vset.pattern.permute.xlu0 2
          %683 = vperm.xlu0 %682, %v377
          %v684 = vpop.permute.xlu0 %683
          %686 = vset.pattern.permute.xlu0 2
          %687 = vperm.xlu0 %686, %v378
          %v688 = vpop.permute.xlu0 %687
          %690 = vset.pattern.permute.xlu0 2
          %691 = vperm.xlu0 %690, %v379
          %v692 = vpop.permute.xlu0 %691
          %694 = vset.pattern.permute.xlu0 2
          %695 = vperm.xlu0 %694, %v380
          %v696 = vpop.permute.xlu0 %695
          %698 = vset.pattern.permute.xlu0 2
          %699 = vperm.xlu0 %698, %v381
          %v700 = vpop.permute.xlu0 %699
          %v702 = vsel %vm606, %v640, 0.0
          %v703 = vsel %vm607, %v640, 0.0
          %v704 = vsel %vm608, %v644, 0.0
          %v705 = vsel %vm609, %v644, 0.0
          %v706 = vsel %vm610, %v648, 0.0
          %v707 = vsel %vm611, %v648, 0.0
          %v708 = vsel %vm612, %v652, 0.0
          %v709 = vsel %vm613, %v652, 0.0
          %v710 = vsel %vm614, %v656, 0.0
          %v711 = vsel %vm615, %v656, 0.0
          %v712 = vsel %vm616, %v660, 0.0
          %v713 = vsel %vm617, %v660, 0.0
          %v714 = vsel %vm618, %v664, 0.0
          %v715 = vsel %vm619, %v664, 0.0
          %v716 = vsel %vm620, %v668, 0.0
          %v717 = vsel %vm621, %v668, 0.0
          %v718 = vsel %vm622, %v672, 0.0
          %v719 = vsel %vm623, %v672, 0.0
          %v720 = vsel %vm624, %v676, 0.0
          %v721 = vsel %vm625, %v676, 0.0
          %v722 = vsel %vm626, %v680, 0.0
          %v723 = vsel %vm627, %v680, 0.0
          %v724 = vsel %vm628, %v684, 0.0
          %v725 = vsel %vm629, %v684, 0.0
          %v726 = vsel %vm630, %v688, 0.0
          %v727 = vsel %vm631, %v688, 0.0
          %v728 = vsel %vm632, %v692, 0.0
          %v729 = vsel %vm633, %v692, 0.0
          %v730 = vsel %vm634, %v696, 0.0
          %v731 = vsel %vm635, %v696, 0.0
          %v732 = vsel %vm636, %v700, 0.0
          %v733 = vsel %vm637, %v700, 0.0
          %v734 = vadd.f32 %v574, %v702
          %v735 = vadd.f32 %v575, %v703
          %v736 = vadd.f32 %v576, %v704
          %v737 = vadd.f32 %v577, %v705
          %v738 = vadd.f32 %v578, %v706
          %v739 = vadd.f32 %v579, %v707
          %v740 = vadd.f32 %v580, %v708
          %v741 = vadd.f32 %v581, %v709
          %v742 = vadd.f32 %v582, %v710
          %v743 = vadd.f32 %v583, %v711
          %v744 = vadd.f32 %v584, %v712
          %v745 = vadd.f32 %v585, %v713
          %v746 = vadd.f32 %v586, %v714
          %v747 = vadd.f32 %v587, %v715
          %v748 = vadd.f32 %v588, %v716
          %v749 = vadd.f32 %v589, %v717
          %v750 = vadd.f32 %v590, %v718
          %v751 = vadd.f32 %v591, %v719
          %v752 = vadd.f32 %v592, %v720
          %v753 = vadd.f32 %v593, %v721
          %v754 = vadd.f32 %v594, %v722
          %v755 = vadd.f32 %v595, %v723
          %v756 = vadd.f32 %v596, %v724
          %v757 = vadd.f32 %v597, %v725
          %v758 = vadd.f32 %v598, %v726
          %v759 = vadd.f32 %v599, %v727
          %v760 = vadd.f32 %v600, %v728
          %v761 = vadd.f32 %v601, %v729
          %v762 = vadd.f32 %v602, %v730
          %v763 = vadd.f32 %v603, %v731
          %v764 = vadd.f32 %v604, %v732
          %v765 = vadd.f32 %v605, %v733
          %vm766 = vcmp.eq.s32.totalorder %v430, 16
          %vm767 = vcmp.eq.s32.totalorder %v431, 16
          %vm768 = vcmp.eq.s32.totalorder %v432, 16
          %vm769 = vcmp.eq.s32.totalorder %v433, 16
          %vm770 = vcmp.eq.s32.totalorder %v434, 16
          %vm771 = vcmp.eq.s32.totalorder %v435, 16
          %vm772 = vcmp.eq.s32.totalorder %v436, 16
          %vm773 = vcmp.eq.s32.totalorder %v437, 16
          %vm774 = vcmp.eq.s32.totalorder %v438, 16
          %vm775 = vcmp.eq.s32.totalorder %v439, 16
          %vm776 = vcmp.eq.s32.totalorder %v440, 16
          %vm777 = vcmp.eq.s32.totalorder %v441, 16
          %vm778 = vcmp.eq.s32.totalorder %v442, 16
          %vm779 = vcmp.eq.s32.totalorder %v443, 16
          %vm780 = vcmp.eq.s32.totalorder %v444, 16
          %vm781 = vcmp.eq.s32.totalorder %v445, 16
          %vm782 = vcmp.eq.s32.totalorder %v446, 16
          %vm783 = vcmp.eq.s32.totalorder %v447, 16
          %vm784 = vcmp.eq.s32.totalorder %v448, 16
          %vm785 = vcmp.eq.s32.totalorder %v449, 16
          %vm786 = vcmp.eq.s32.totalorder %v450, 16
          %vm787 = vcmp.eq.s32.totalorder %v451, 16
          %vm788 = vcmp.eq.s32.totalorder %v452, 16
          %vm789 = vcmp.eq.s32.totalorder %v453, 16
          %vm790 = vcmp.eq.s32.totalorder %v454, 16
          %vm791 = vcmp.eq.s32.totalorder %v455, 16
          %vm792 = vcmp.eq.s32.totalorder %v456, 16
          %vm793 = vcmp.eq.s32.totalorder %v457, 16
          %vm794 = vcmp.eq.s32.totalorder %v458, 16
          %vm795 = vcmp.eq.s32.totalorder %v459, 16
          %vm796 = vcmp.eq.s32.totalorder %v460, 16
          %vm797 = vcmp.eq.s32.totalorder %v461, 16
          %798 = vset.pattern.permute.xlu0 1
          %799 = vperm.xlu0 %798, %v366
          %v800 = vpop.permute.xlu0 %799
          %802 = vset.pattern.permute.xlu0 1
          %803 = vperm.xlu0 %802, %v367
          %v804 = vpop.permute.xlu0 %803
          %806 = vset.pattern.permute.xlu0 1
          %807 = vperm.xlu0 %806, %v368
          %v808 = vpop.permute.xlu0 %807
          %810 = vset.pattern.permute.xlu0 1
          %811 = vperm.xlu0 %810, %v369
          %v812 = vpop.permute.xlu0 %811
          %814 = vset.pattern.permute.xlu0 1
          %815 = vperm.xlu0 %814, %v370
          %v816 = vpop.permute.xlu0 %815
          %818 = vset.pattern.permute.xlu0 1
          %819 = vperm.xlu0 %818, %v371
          %v820 = vpop.permute.xlu0 %819
          %822 = vset.pattern.permute.xlu0 1
          %823 = vperm.xlu0 %822, %v372
          %v824 = vpop.permute.xlu0 %823
          %826 = vset.pattern.permute.xlu0 1
          %827 = vperm.xlu0 %826, %v373
          %v828 = vpop.permute.xlu0 %827
          %830 = vset.pattern.permute.xlu0 1
          %831 = vperm.xlu0 %830, %v374
          %v832 = vpop.permute.xlu0 %831
          %834 = vset.pattern.permute.xlu0 1
          %835 = vperm.xlu0 %834, %v375
          %v836 = vpop.permute.xlu0 %835
          %838 = vset.pattern.permute.xlu0 1
          %839 = vperm.xlu0 %838, %v376
          %v840 = vpop.permute.xlu0 %839
          %842 = vset.pattern.permute.xlu0 1
          %843 = vperm.xlu0 %842, %v377
          %v844 = vpop.permute.xlu0 %843
          %846 = vset.pattern.permute.xlu0 1
          %847 = vperm.xlu0 %846, %v378
          %v848 = vpop.permute.xlu0 %847
          %850 = vset.pattern.permute.xlu0 1
          %851 = vperm.xlu0 %850, %v379
          %v852 = vpop.permute.xlu0 %851
          %854 = vset.pattern.permute.xlu0 1
          %855 = vperm.xlu0 %854, %v380
          %v856 = vpop.permute.xlu0 %855
          %858 = vset.pattern.permute.xlu0 1
          %859 = vperm.xlu0 %858, %v381
          %v860 = vpop.permute.xlu0 %859
          %v862 = vsel %vm766, %v800, 0.0
          %v863 = vsel %vm767, %v800, 0.0
          %v864 = vsel %vm768, %v804, 0.0
          %v865 = vsel %vm769, %v804, 0.0
          %v866 = vsel %vm770, %v808, 0.0
          %v867 = vsel %vm771, %v808, 0.0
          %v868 = vsel %vm772, %v812, 0.0
          %v869 = vsel %vm773, %v812, 0.0
          %v870 = vsel %vm774, %v816, 0.0
          %v871 = vsel %vm775, %v816, 0.0
          %v872 = vsel %vm776, %v820, 0.0
          %v873 = vsel %vm777, %v820, 0.0
          %v874 = vsel %vm778, %v824, 0.0
          %v875 = vsel %vm779, %v824, 0.0
          %v876 = vsel %vm780, %v828, 0.0
          %v877 = vsel %vm781, %v828, 0.0
          %v878 = vsel %vm782, %v832, 0.0
          %v879 = vsel %vm783, %v832, 0.0
          %v880 = vsel %vm784, %v836, 0.0
          %v881 = vsel %vm785, %v836, 0.0
          %v882 = vsel %vm786, %v840, 0.0
          %v883 = vsel %vm787, %v840, 0.0
          %v884 = vsel %vm788, %v844, 0.0
          %v885 = vsel %vm789, %v844, 0.0
          %v886 = vsel %vm790, %v848, 0.0
          %v887 = vsel %vm791, %v848, 0.0
          %v888 = vsel %vm792, %v852, 0.0
          %v889 = vsel %vm793, %v852, 0.0
          %v890 = vsel %vm794, %v856, 0.0
          %v891 = vsel %vm795, %v856, 0.0
          %v892 = vsel %vm796, %v860, 0.0
          %v893 = vsel %vm797, %v860, 0.0
          %v894 = vadd.f32 %v734, %v862
          %v895 = vadd.f32 %v735, %v863
          %v896 = vadd.f32 %v736, %v864
          %v897 = vadd.f32 %v737, %v865
          %v898 = vadd.f32 %v738, %v866
          %v899 = vadd.f32 %v739, %v867
          %v900 = vadd.f32 %v740, %v868
          %v901 = vadd.f32 %v741, %v869
          %v902 = vadd.f32 %v742, %v870
          %v903 = vadd.f32 %v743, %v871
          %v904 = vadd.f32 %v744, %v872
          %v905 = vadd.f32 %v745, %v873
          %v906 = vadd.f32 %v746, %v874
          %v907 = vadd.f32 %v747, %v875
          %v908 = vadd.f32 %v748, %v876
          %v909 = vadd.f32 %v749, %v877
          %v910 = vadd.f32 %v750, %v878
          %v911 = vadd.f32 %v751, %v879
          %v912 = vadd.f32 %v752, %v880
          %v913 = vadd.f32 %v753, %v881
          %v914 = vadd.f32 %v754, %v882
          %v915 = vadd.f32 %v755, %v883
          %v916 = vadd.f32 %v756, %v884
          %v917 = vadd.f32 %v757, %v885
          %v918 = vadd.f32 %v758, %v886
          %v919 = vadd.f32 %v759, %v887
          %v920 = vadd.f32 %v760, %v888
          %v921 = vadd.f32 %v761, %v889
          %v922 = vadd.f32 %v762, %v890
          %v923 = vadd.f32 %v763, %v891
          %v924 = vadd.f32 %v764, %v892
          %v925 = vadd.f32 %v765, %v893
          %vm926 = vcmp.eq.s32.totalorder %v430, 17
          %vm927 = vcmp.eq.s32.totalorder %v431, 17
          %vm928 = vcmp.eq.s32.totalorder %v432, 17
          %vm929 = vcmp.eq.s32.totalorder %v433, 17
          %vm930 = vcmp.eq.s32.totalorder %v434, 17
          %vm931 = vcmp.eq.s32.totalorder %v435, 17
          %vm932 = vcmp.eq.s32.totalorder %v436, 17
          %vm933 = vcmp.eq.s32.totalorder %v437, 17
          %vm934 = vcmp.eq.s32.totalorder %v438, 17
          %vm935 = vcmp.eq.s32.totalorder %v439, 17
          %vm936 = vcmp.eq.s32.totalorder %v440, 17
          %vm937 = vcmp.eq.s32.totalorder %v441, 17
          %vm938 = vcmp.eq.s32.totalorder %v442, 17
          %vm939 = vcmp.eq.s32.totalorder %v443, 17
          %vm940 = vcmp.eq.s32.totalorder %v444, 17
          %vm941 = vcmp.eq.s32.totalorder %v445, 17
          %vm942 = vcmp.eq.s32.totalorder %v446, 17
          %vm943 = vcmp.eq.s32.totalorder %v447, 17
          %vm944 = vcmp.eq.s32.totalorder %v448, 17
          %vm945 = vcmp.eq.s32.totalorder %v449, 17
          %vm946 = vcmp.eq.s32.totalorder %v450, 17
          %vm947 = vcmp.eq.s32.totalorder %v451, 17
          %vm948 = vcmp.eq.s32.totalorder %v452, 17
          %vm949 = vcmp.eq.s32.totalorder %v453, 17
          %vm950 = vcmp.eq.s32.totalorder %v454, 17
          %vm951 = vcmp.eq.s32.totalorder %v455, 17
          %vm952 = vcmp.eq.s32.totalorder %v456, 17
          %vm953 = vcmp.eq.s32.totalorder %v457, 17
          %vm954 = vcmp.eq.s32.totalorder %v458, 17
          %vm955 = vcmp.eq.s32.totalorder %v459, 17
          %vm956 = vcmp.eq.s32.totalorder %v460, 17
          %vm957 = vcmp.eq.s32.totalorder %v461, 17
          %958 = vset.pattern.permute.xlu0 3
          %959 = vperm.xlu0 %958, %v366
          %v960 = vpop.permute.xlu0 %959
          %962 = vset.pattern.permute.xlu0 3
          %963 = vperm.xlu0 %962, %v367
          %v964 = vpop.permute.xlu0 %963
          %966 = vset.pattern.permute.xlu0 3
          %967 = vperm.xlu0 %966, %v368
          %v968 = vpop.permute.xlu0 %967
          %970 = vset.pattern.permute.xlu0 3
          %971 = vperm.xlu0 %970, %v369
          %v972 = vpop.permute.xlu0 %971
          %974 = vset.pattern.permute.xlu0 3
          %975 = vperm.xlu0 %974, %v370
          %v976 = vpop.permute.xlu0 %975
          %978 = vset.pattern.permute.xlu0 3
          %979 = vperm.xlu0 %978, %v371
          %v980 = vpop.permute.xlu0 %979
          %982 = vset.pattern.permute.xlu0 3
          %983 = vperm.xlu0 %982, %v372
          %v984 = vpop.permute.xlu0 %983
          %986 = vset.pattern.permute.xlu0 3
          %987 = vperm.xlu0 %986, %v373
          %v988 = vpop.permute.xlu0 %987
          %990 = vset.pattern.permute.xlu0 3
          %991 = vperm.xlu0 %990, %v374
          %v992 = vpop.permute.xlu0 %991
          %994 = vset.pattern.permute.xlu0 3
          %995 = vperm.xlu0 %994, %v375
          %v996 = vpop.permute.xlu0 %995
          %998 = vset.pattern.permute.xlu0 3
          %999 = vperm.xlu0 %998, %v376
          %v1000 = vpop.permute.xlu0 %999
          %1002 = vset.pattern.permute.xlu0 3
          %1003 = vperm.xlu0 %1002, %v377
          %v1004 = vpop.permute.xlu0 %1003
          %1006 = vset.pattern.permute.xlu0 3
          %1007 = vperm.xlu0 %1006, %v378
          %v1008 = vpop.permute.xlu0 %1007
          %1010 = vset.pattern.permute.xlu0 3
          %1011 = vperm.xlu0 %1010, %v379
          %v1012 = vpop.permute.xlu0 %1011
          %1014 = vset.pattern.permute.xlu0 3
          %1015 = vperm.xlu0 %1014, %v380
          %v1016 = vpop.permute.xlu0 %1015
          %1018 = vset.pattern.permute.xlu0 3
          %1019 = vperm.xlu0 %1018, %v381
          %v1020 = vpop.permute.xlu0 %1019
          %v1022 = vsel %vm926, %v960, 0.0
          %v1023 = vsel %vm927, %v960, 0.0
          %v1024 = vsel %vm928, %v964, 0.0
          %v1025 = vsel %vm929, %v964, 0.0
          %v1026 = vsel %vm930, %v968, 0.0
          %v1027 = vsel %vm931, %v968, 0.0
          %v1028 = vsel %vm932, %v972, 0.0
          %v1029 = vsel %vm933, %v972, 0.0
          %v1030 = vsel %vm934, %v976, 0.0
          %v1031 = vsel %vm935, %v976, 0.0
          %v1032 = vsel %vm936, %v980, 0.0
          %v1033 = vsel %vm937, %v980, 0.0
          %v1034 = vsel %vm938, %v984, 0.0
          %v1035 = vsel %vm939, %v984, 0.0
          %v1036 = vsel %vm940, %v988, 0.0
          %v1037 = vsel %vm941, %v988, 0.0
          %v1038 = vsel %vm942, %v992, 0.0
          %v1039 = vsel %vm943, %v992, 0.0
          %v1040 = vsel %vm944, %v996, 0.0
          %v1041 = vsel %vm945, %v996, 0.0
          %v1042 = vsel %vm946, %v1000, 0.0
          %v1043 = vsel %vm947, %v1000, 0.0
          %v1044 = vsel %vm948, %v1004, 0.0
          %v1045 = vsel %vm949, %v1004, 0.0
          %v1046 = vsel %vm950, %v1008, 0.0
          %v1047 = vsel %vm951, %v1008, 0.0
          %v1048 = vsel %vm952, %v1012, 0.0
          %v1049 = vsel %vm953, %v1012, 0.0
          %v1050 = vsel %vm954, %v1016, 0.0
          %v1051 = vsel %vm955, %v1016, 0.0
          %v1052 = vsel %vm956, %v1020, 0.0
          %v1053 = vsel %vm957, %v1020, 0.0
          %v1054 = vadd.f32 %v894, %v1022
          %v1055 = vadd.f32 %v895, %v1023
          %v1056 = vadd.f32 %v896, %v1024
          %v1057 = vadd.f32 %v897, %v1025
          %v1058 = vadd.f32 %v898, %v1026
          %v1059 = vadd.f32 %v899, %v1027
          %v1060 = vadd.f32 %v900, %v1028
          %v1061 = vadd.f32 %v901, %v1029
          %v1062 = vadd.f32 %v902, %v1030
          %v1063 = vadd.f32 %v903, %v1031
          %v1064 = vadd.f32 %v904, %v1032
          %v1065 = vadd.f32 %v905, %v1033
          %v1066 = vadd.f32 %v906, %v1034
          %v1067 = vadd.f32 %v907, %v1035
          %v1068 = vadd.f32 %v908, %v1036
          %v1069 = vadd.f32 %v909, %v1037
          %v1070 = vadd.f32 %v910, %v1038
          %v1071 = vadd.f32 %v911, %v1039
          %v1072 = vadd.f32 %v912, %v1040
          %v1073 = vadd.f32 %v913, %v1041
          %v1074 = vadd.f32 %v914, %v1042
          %v1075 = vadd.f32 %v915, %v1043
          %v1076 = vadd.f32 %v916, %v1044
          %v1077 = vadd.f32 %v917, %v1045
          %v1078 = vadd.f32 %v918, %v1046
          %v1079 = vadd.f32 %v919, %v1047
          %v1080 = vadd.f32 %v920, %v1048
          %v1081 = vadd.f32 %v921, %v1049
          %v1082 = vadd.f32 %v922, %v1050
          %v1083 = vadd.f32 %v923, %v1051
          %v1084 = vadd.f32 %v924, %v1052
          %v1085 = vadd.f32 %v925, %v1053
          %v1086 = vld [vmem:[#allocation9] sm:$0xf]
          %v1087 = vand.u32 %v1055, 4294901760
          %1088 = vmatprep.subr.mxu0 %v1087
          %v1089 = vand.u32 %v1054, 4294901760
          %1090 = vmatpush1.msra.mxu0 %v1089
          %v1091 = vand.u32 %v1057, 4294901760
          %1092 = vmatprep.subr.mxu0 %v1091
          %v1093 = vand.u32 %v1056, 4294901760
          %1094 = vmatpush1.msra.mxu0 %v1093
          %v1095 = vand.u32 %v1059, 4294901760
          %1096 = vmatprep.subr.mxu0 %v1095
          %v1097 = vand.u32 %v1058, 4294901760
          %1098 = vmatpush1.msra.mxu0 %v1097
          %v1099 = vand.u32 %v1061, 4294901760
          %1100 = vmatprep.subr.mxu0 %v1099
          %v1101 = vand.u32 %v1060, 4294901760
          %1102 = vmatpush1.msra.mxu0 %v1101
          %v1103 = vand.u32 %v1063, 4294901760
          %1104 = vmatprep.subr.mxu0 %v1103
          %v1105 = vand.u32 %v1062, 4294901760
          %1106 = vmatpush1.msra.mxu0 %v1105
          %v1107 = vand.u32 %v1065, 4294901760
          %1108 = vmatprep.subr.mxu0 %v1107
          %v1109 = vand.u32 %v1064, 4294901760
          %1110 = vmatpush1.msra.mxu0 %v1109
          %v1111 = vand.u32 %v1067, 4294901760
          %1112 = vmatprep.subr.mxu0 %v1111
          %v1113 = vand.u32 %v1066, 4294901760
          %1114 = vmatpush1.msra.mxu0 %v1113
          %v1115 = vand.u32 %v1069, 4294901760
          %1116 = vmatprep.subr.mxu0 %v1115
          %v1117 = vand.u32 %v1068, 4294901760
          %1118 = vmatpush1.msra.mxu0 %v1117
          %v1119 = vand.u32 %v1071, 4294901760
          %1120 = vmatprep.subr.mxu0 %v1119
          %v1121 = vand.u32 %v1070, 4294901760
          %1122 = vmatpush1.msra.mxu0 %v1121
          %v1123 = vand.u32 %v1073, 4294901760
          %1124 = vmatprep.subr.mxu0 %v1123
          %v1125 = vand.u32 %v1072, 4294901760
          %1126 = vmatpush1.msra.mxu0 %v1125
          %v1127 = vand.u32 %v1075, 4294901760
          %1128 = vmatprep.subr.mxu0 %v1127
          %v1129 = vand.u32 %v1074, 4294901760
          %1130 = vmatpush1.msra.mxu0 %v1129
          %v1131 = vand.u32 %v1077, 4294901760
          %1132 = vmatprep.subr.mxu0 %v1131
          %v1133 = vand.u32 %v1076, 4294901760
          %1134 = vmatpush1.msra.mxu0 %v1133
          %v1135 = vand.u32 %v1079, 4294901760
          %1136 = vmatprep.subr.mxu0 %v1135
          %v1137 = vand.u32 %v1078, 4294901760
          %1138 = vmatpush1.msra.mxu0 %v1137
          %v1139 = vand.u32 %v1081, 4294901760
          %1140 = vmatprep.subr.mxu0 %v1139
          %v1141 = vand.u32 %v1080, 4294901760
          %1142 = vmatpush1.msra.mxu0 %v1141
          %v1143 = vand.u32 %v1083, 4294901760
          %1144 = vmatprep.subr.mxu0 %v1143
          %v1145 = vand.u32 %v1082, 4294901760
          %1146 = vmatpush1.msra.mxu0 %v1145
          %v1147 = vand.u32 %v1085, 4294901760
          %1148 = vmatprep.subr.mxu0 %v1147
          %v1149 = vand.u32 %v1084, 4294901760
          %1150 = vmatpush1.msra.mxu0 %v1149
          %1151 = vmatprep.subr.mxu0 0.0
          %1152 = vmatpush1.msra.mxu0 0.0
          %1153 = vmatprep.subr.mxu0 0.0
          %1154 = vmatpush1.msra.mxu0 0.0
          %1155 = vmatprep.subr.mxu0 0.0
          %1156 = vmatpush1.msra.mxu0 0.0
          %1157 = vmatprep.subr.mxu0 0.0
          %1158 = vmatpush1.msra.mxu0 0.0
          %1159 = vmatprep.subr.mxu0 0.0
          %1160 = vmatpush1.msra.mxu0 0.0
          %1161 = vmatprep.subr.mxu0 0.0
          %1162 = vmatpush1.msra.mxu0 0.0
          %1163 = vmatprep.subr.mxu0 0.0
          %1164 = vmatpush1.msra.mxu0 0.0
          %1165 = vmatprep.subr.mxu0 0.0
          %1166 = vmatpush1.msra.mxu0 0.0
          %1167 = vmatprep.subr.mxu0 0.0
          %1168 = vmatpush1.msra.mxu0 0.0
          %1169 = vmatprep.subr.mxu0 0.0
          %1170 = vmatpush1.msra.mxu0 0.0
          %1171 = vmatprep.subr.mxu0 0.0
          %1172 = vmatpush1.msra.mxu0 0.0
          %1173 = vmatprep.subr.mxu0 0.0
          %1174 = vmatpush1.msra.mxu0 0.0
          %1175 = vmatprep.subr.mxu0 0.0
          %1176 = vmatpush1.msra.mxu0 0.0
          %1177 = vmatprep.subr.mxu0 0.0
          %1178 = vmatpush1.msra.mxu0 0.0
          %1179 = vmatprep.subr.mxu0 0.0
          %1180 = vmatpush1.msra.mxu0 0.0
          %1181 = vmatprep.subr.mxu0 0.0
          %1182 = vmatpush1.msra.mxu0 0.0
          %1183 = vmatprep.mubr.f32.mxu0 0.0
          %v1184 = vand.u32 %v1086, 4294901760
          %v1185 = vsub.f32 %v1086, %v1184
          %v1186 = vand.u32 %v1185, 4294901760
          %v1187 = vsub.f32 %v1185, %v1186
          %v1188 = vand.u32 %v1187, 4294901760
          %1189 = vmatmul.mubr.f32.gmra.mrb[0].mxu0 %v1188
          %v1190 = vpop.f32.mrb[0].mxu0
          %v1191 = vadd.f32 0.0, %v1190
          %v1192 = vpop.f32.mrb[0].mxu0
          %v1193 = vadd.f32 0.0, %v1192
          %1194 = vdwg.mxu0
          %v1195 = vand.u32 %v1055, 4294901760
          %v1196 = vsub.f32 %v1055, %v1195
          %v1197 = vand.u32 %v1196, 4294901760
          %v1198 = vsub.f32 %v1196, %v1197
          %v1199 = vand.u32 %v1198, 4294901760
          %1200 = vmatprep.subr.mxu0 %v1199
          %v1201 = vand.u32 %v1054, 4294901760
          %v1202 = vsub.f32 %v1054, %v1201
          %v1203 = vand.u32 %v1202, 4294901760
          %v1204 = vsub.f32 %v1202, %v1203
          %v1205 = vand.u32 %v1204, 4294901760
          %1206 = vmatpush1.msra.mxu0 %v1205
          %v1207 = vand.u32 %v1057, 4294901760
          %v1208 = vsub.f32 %v1057, %v1207
          %v1209 = vand.u32 %v1208, 4294901760
          %v1210 = vsub.f32 %v1208, %v1209
          %v1211 = vand.u32 %v1210, 4294901760
          %1212 = vmatprep.subr.mxu0 %v1211
          %v1213 = vand.u32 %v1056, 4294901760
          %v1214 = vsub.f32 %v1056, %v1213
          %v1215 = vand.u32 %v1214, 4294901760
          %v1216 = vsub.f32 %v1214, %v1215
          %v1217 = vand.u32 %v1216, 4294901760
          %1218 = vmatpush1.msra.mxu0 %v1217
          %v1219 = vand.u32 %v1059, 4294901760
          %v1220 = vsub.f32 %v1059, %v1219
          %v1221 = vand.u32 %v1220, 4294901760
          %v1222 = vsub.f32 %v1220, %v1221
          %v1223 = vand.u32 %v1222, 4294901760
          %1224 = vmatprep.subr.mxu0 %v1223
          %v1225 = vand.u32 %v1058, 4294901760
          %v1226 = vsub.f32 %v1058, %v1225
          %v1227 = vand.u32 %v1226, 4294901760
          %v1228 = vsub.f32 %v1226, %v1227
          %v1229 = vand.u32 %v1228, 4294901760
          %1230 = vmatpush1.msra.mxu0 %v1229
          %v1231 = vand.u32 %v1061, 4294901760
          %v1232 = vsub.f32 %v1061, %v1231
          %v1233 = vand.u32 %v1232, 4294901760
          %v1234 = vsub.f32 %v1232, %v1233
          %v1235 = vand.u32 %v1234, 4294901760
          %1236 = vmatprep.subr.mxu0 %v1235
          %v1237 = vand.u32 %v1060, 4294901760
          %v1238 = vsub.f32 %v1060, %v1237
          %v1239 = vand.u32 %v1238, 4294901760
          %v1240 = vsub.f32 %v1238, %v1239
          %v1241 = vand.u32 %v1240, 4294901760
          %1242 = vmatpush1.msra.mxu0 %v1241
          %v1243 = vand.u32 %v1063, 4294901760
          %v1244 = vsub.f32 %v1063, %v1243
          %v1245 = vand.u32 %v1244, 4294901760
          %v1246 = vsub.f32 %v1244, %v1245
          %v1247 = vand.u32 %v1246, 4294901760
          %1248 = vmatprep.subr.mxu0 %v1247
          %v1249 = vand.u32 %v1062, 4294901760
          %v1250 = vsub.f32 %v1062, %v1249
          %v1251 = vand.u32 %v1250, 4294901760
          %v1252 = vsub.f32 %v1250, %v1251
          %v1253 = vand.u32 %v1252, 4294901760
          %1254 = vmatpush1.msra.mxu0 %v1253
          %v1255 = vand.u32 %v1065, 4294901760
          %v1256 = vsub.f32 %v1065, %v1255
          %v1257 = vand.u32 %v1256, 4294901760
          %v1258 = vsub.f32 %v1256, %v1257
          %v1259 = vand.u32 %v1258, 4294901760
          %1260 = vmatprep.subr.mxu0 %v1259
          %v1261 = vand.u32 %v1064, 4294901760
          %v1262 = vsub.f32 %v1064, %v1261
          %v1263 = vand.u32 %v1262, 4294901760
          %v1264 = vsub.f32 %v1262, %v1263
          %v1265 = vand.u32 %v1264, 4294901760
          %1266 = vmatpush1.msra.mxu0 %v1265
          %v1267 = vand.u32 %v1067, 4294901760
          %v1268 = vsub.f32 %v1067, %v1267
          %v1269 = vand.u32 %v1268, 4294901760
          %v1270 = vsub.f32 %v1268, %v1269
          %v1271 = vand.u32 %v1270, 4294901760
          %1272 = vmatprep.subr.mxu0 %v1271
          %v1273 = vand.u32 %v1066, 4294901760
          %v1274 = vsub.f32 %v1066, %v1273
          %v1275 = vand.u32 %v1274, 4294901760
          %v1276 = vsub.f32 %v1274, %v1275
          %v1277 = vand.u32 %v1276, 4294901760
          %1278 = vmatpush1.msra.mxu0 %v1277
          %v1279 = vand.u32 %v1069, 4294901760
          %v1280 = vsub.f32 %v1069, %v1279
          %v1281 = vand.u32 %v1280, 4294901760
          %v1282 = vsub.f32 %v1280, %v1281
          %v1283 = vand.u32 %v1282, 4294901760
          %1284 = vmatprep.subr.mxu0 %v1283
          %v1285 = vand.u32 %v1068, 4294901760
          %v1286 = vsub.f32 %v1068, %v1285
          %v1287 = vand.u32 %v1286, 4294901760
          %v1288 = vsub.f32 %v1286, %v1287
          %v1289 = vand.u32 %v1288, 4294901760
          %1290 = vmatpush1.msra.mxu0 %v1289
          %v1291 = vand.u32 %v1071, 4294901760
          %v1292 = vsub.f32 %v1071, %v1291
          %v1293 = vand.u32 %v1292, 4294901760
          %v1294 = vsub.f32 %v1292, %v1293
          %v1295 = vand.u32 %v1294, 4294901760
          %1296 = vmatprep.subr.mxu0 %v1295
          %v1297 = vand.u32 %v1070, 4294901760
          %v1298 = vsub.f32 %v1070, %v1297
          %v1299 = vand.u32 %v1298, 4294901760
          %v1300 = vsub.f32 %v1298, %v1299
          %v1301 = vand.u32 %v1300, 4294901760
          %1302 = vmatpush1.msra.mxu0 %v1301
          %v1303 = vand.u32 %v1073, 4294901760
          %v1304 = vsub.f32 %v1073, %v1303
          %v1305 = vand.u32 %v1304, 4294901760
          %v1306 = vsub.f32 %v1304, %v1305
          %v1307 = vand.u32 %v1306, 4294901760
          %1308 = vmatprep.subr.mxu0 %v1307
          %v1309 = vand.u32 %v1072, 4294901760
          %v1310 = vsub.f32 %v1072, %v1309
          %v1311 = vand.u32 %v1310, 4294901760
          %v1312 = vsub.f32 %v1310, %v1311
          %v1313 = vand.u32 %v1312, 4294901760
          %1314 = vmatpush1.msra.mxu0 %v1313
          %v1315 = vand.u32 %v1075, 4294901760
          %v1316 = vsub.f32 %v1075, %v1315
          %v1317 = vand.u32 %v1316, 4294901760
          %v1318 = vsub.f32 %v1316, %v1317
          %v1319 = vand.u32 %v1318, 4294901760
          %1320 = vmatprep.subr.mxu0 %v1319
          %v1321 = vand.u32 %v1074, 4294901760
          %v1322 = vsub.f32 %v1074, %v1321
          %v1323 = vand.u32 %v1322, 4294901760
          %v1324 = vsub.f32 %v1322, %v1323
          %v1325 = vand.u32 %v1324, 4294901760
          %1326 = vmatpush1.msra.mxu0 %v1325
          %v1327 = vand.u32 %v1077, 4294901760
          %v1328 = vsub.f32 %v1077, %v1327
          %v1329 = vand.u32 %v1328, 4294901760
          %v1330 = vsub.f32 %v1328, %v1329
          %v1331 = vand.u32 %v1330, 4294901760
          %1332 = vmatprep.subr.mxu0 %v1331
          %v1333 = vand.u32 %v1076, 4294901760
          %v1334 = vsub.f32 %v1076, %v1333
          %v1335 = vand.u32 %v1334, 4294901760
          %v1336 = vsub.f32 %v1334, %v1335
          %v1337 = vand.u32 %v1336, 4294901760
          %1338 = vmatpush1.msra.mxu0 %v1337
          %v1339 = vand.u32 %v1079, 4294901760
          %v1340 = vsub.f32 %v1079, %v1339
          %v1341 = vand.u32 %v1340, 4294901760
          %v1342 = vsub.f32 %v1340, %v1341
          %v1343 = vand.u32 %v1342, 4294901760
          %1344 = vmatprep.subr.mxu0 %v1343
          %v1345 = vand.u32 %v1078, 4294901760
          %v1346 = vsub.f32 %v1078, %v1345
          %v1347 = vand.u32 %v1346, 4294901760
          %v1348 = vsub.f32 %v1346, %v1347
          %v1349 = vand.u32 %v1348, 4294901760
          %1350 = vmatpush1.msra.mxu0 %v1349
          %v1351 = vand.u32 %v1081, 4294901760
          %v1352 = vsub.f32 %v1081, %v1351
          %v1353 = vand.u32 %v1352, 4294901760
          %v1354 = vsub.f32 %v1352, %v1353
          %v1355 = vand.u32 %v1354, 4294901760
          %1356 = vmatprep.subr.mxu0 %v1355
          %v1357 = vand.u32 %v1080, 4294901760
          %v1358 = vsub.f32 %v1080, %v1357
          %v1359 = vand.u32 %v1358, 4294901760
          %v1360 = vsub.f32 %v1358, %v1359
          %v1361 = vand.u32 %v1360, 4294901760
          %1362 = vmatpush1.msra.mxu0 %v1361
          %v1363 = vand.u32 %v1083, 4294901760
          %v1364 = vsub.f32 %v1083, %v1363
          %v1365 = vand.u32 %v1364, 4294901760
          %v1366 = vsub.f32 %v1364, %v1365
          %v1367 = vand.u32 %v1366, 4294901760
          %1368 = vmatprep.subr.mxu0 %v1367
          %v1369 = vand.u32 %v1082, 4294901760
          %v1370 = vsub.f32 %v1082, %v1369
          %v1371 = vand.u32 %v1370, 4294901760
          %v1372 = vsub.f32 %v1370, %v1371
          %v1373 = vand.u32 %v1372, 4294901760
          %1374 = vmatpush1.msra.mxu0 %v1373
          %v1375 = vand.u32 %v1085, 4294901760
          %v1376 = vsub.f32 %v1085, %v1375
          %v1377 = vand.u32 %v1376, 4294901760
          %v1378 = vsub.f32 %v1376, %v1377
          %v1379 = vand.u32 %v1378, 4294901760
          %1380 = vmatprep.subr.mxu0 %v1379
          %v1381 = vand.u32 %v1084, 4294901760
          %v1382 = vsub.f32 %v1084, %v1381
          %v1383 = vand.u32 %v1382, 4294901760
          %v1384 = vsub.f32 %v1382, %v1383
          %v1385 = vand.u32 %v1384, 4294901760
          %1386 = vmatpush1.msra.mxu0 %v1385
          %1387 = vmatprep.subr.mxu0 0.0
          %1388 = vmatpush1.msra.mxu0 0.0
          %1389 = vmatprep.subr.mxu0 0.0
          %1390 = vmatpush1.msra.mxu0 0.0
          %1391 = vmatprep.subr.mxu0 0.0
          %1392 = vmatpush1.msra.mxu0 0.0
          %1393 = vmatprep.subr.mxu0 0.0
          %1394 = vmatpush1.msra.mxu0 0.0
          %1395 = vmatprep.subr.mxu0 0.0
          %1396 = vmatpush1.msra.mxu0 0.0
          %1397 = vmatprep.subr.mxu0 0.0
          %1398 = vmatpush1.msra.mxu0 0.0
          %1399 = vmatprep.subr.mxu0 0.0
          %1400 = vmatpush1.msra.mxu0 0.0
          %1401 = vmatprep.subr.mxu0 0.0
          %1402 = vmatpush1.msra.mxu0 0.0
          %1403 = vmatprep.subr.mxu0 0.0
          %1404 = vmatpush1.msra.mxu0 0.0
          %1405 = vmatprep.subr.mxu0 0.0
          %1406 = vmatpush1.msra.mxu0 0.0
          %1407 = vmatprep.subr.mxu0 0.0
          %1408 = vmatpush1.msra.mxu0 0.0
          %1409 = vmatprep.subr.mxu0 0.0
          %1410 = vmatpush1.msra.mxu0 0.0
          %1411 = vmatprep.subr.mxu0 0.0
          %1412 = vmatpush1.msra.mxu0 0.0
          %1413 = vmatprep.subr.mxu0 0.0
          %1414 = vmatpush1.msra.mxu0 0.0
          %1415 = vmatprep.subr.mxu0 0.0
          %1416 = vmatpush1.msra.mxu0 0.0
          %1417 = vmatprep.subr.mxu0 0.0
          %1418 = vmatpush1.msra.mxu0 0.0
          %1419 = vmatprep.mubr.f32.mxu0 0.0
          %v1420 = vand.u32 %v1086, 4294901760
          %1421 = vmatmul.mubr.f32.gmra.mrb[0].mxu0 %v1420
          %v1422 = vpop.f32.mrb[0].mxu0
          %v1423 = vadd.f32 %v1191, %v1422
          %v1424 = vpop.f32.mrb[0].mxu0
          %v1425 = vadd.f32 %v1193, %v1424
          %1426 = vdwg.mxu0
          %v1427 = vand.u32 %v1055, 4294901760
          %v1428 = vsub.f32 %v1055, %v1427
          %1429 = vmatprep.subr.mxu0 %v1428
          %v1430 = vand.u32 %v1054, 4294901760
          %v1431 = vsub.f32 %v1054, %v1430
          %1432 = vmatpush1.msra.mxu0 %v1431
          %v1433 = vand.u32 %v1057, 4294901760
          %v1434 = vsub.f32 %v1057, %v1433
          %1435 = vmatprep.subr.mxu0 %v1434
          %v1436 = vand.u32 %v1056, 4294901760
          %v1437 = vsub.f32 %v1056, %v1436
          %1438 = vmatpush1.msra.mxu0 %v1437
          %v1439 = vand.u32 %v1059, 4294901760
          %v1440 = vsub.f32 %v1059, %v1439
          %1441 = vmatprep.subr.mxu0 %v1440
          %v1442 = vand.u32 %v1058, 4294901760
          %v1443 = vsub.f32 %v1058, %v1442
          %1444 = vmatpush1.msra.mxu0 %v1443
          %v1445 = vand.u32 %v1061, 4294901760
          %v1446 = vsub.f32 %v1061, %v1445
          %1447 = vmatprep.subr.mxu0 %v1446
          %v1448 = vand.u32 %v1060, 4294901760
          %v1449 = vsub.f32 %v1060, %v1448
          %1450 = vmatpush1.msra.mxu0 %v1449
          %v1451 = vand.u32 %v1063, 4294901760
          %v1452 = vsub.f32 %v1063, %v1451
          %1453 = vmatprep.subr.mxu0 %v1452
          %v1454 = vand.u32 %v1062, 4294901760
          %v1455 = vsub.f32 %v1062, %v1454
          %1456 = vmatpush1.msra.mxu0 %v1455
          %v1457 = vand.u32 %v1065, 4294901760
          %v1458 = vsub.f32 %v1065, %v1457
          %1459 = vmatprep.subr.mxu0 %v1458
          %v1460 = vand.u32 %v1064, 4294901760
          %v1461 = vsub.f32 %v1064, %v1460
          %1462 = vmatpush1.msra.mxu0 %v1461
          %v1463 = vand.u32 %v1067, 4294901760
          %v1464 = vsub.f32 %v1067, %v1463
          %1465 = vmatprep.subr.mxu0 %v1464
          %v1466 = vand.u32 %v1066, 4294901760
          %v1467 = vsub.f32 %v1066, %v1466
          %1468 = vmatpush1.msra.mxu0 %v1467
          %v1469 = vand.u32 %v1069, 4294901760
          %v1470 = vsub.f32 %v1069, %v1469
          %1471 = vmatprep.subr.mxu0 %v1470
          %v1472 = vand.u32 %v1068, 4294901760
          %v1473 = vsub.f32 %v1068, %v1472
          %1474 = vmatpush1.msra.mxu0 %v1473
          %v1475 = vand.u32 %v1071, 4294901760
          %v1476 = vsub.f32 %v1071, %v1475
          %1477 = vmatprep.subr.mxu0 %v1476
          %v1478 = vand.u32 %v1070, 4294901760
          %v1479 = vsub.f32 %v1070, %v1478
          %1480 = vmatpush1.msra.mxu0 %v1479
          %v1481 = vand.u32 %v1073, 4294901760
          %v1482 = vsub.f32 %v1073, %v1481
          %1483 = vmatprep.subr.mxu0 %v1482
          %v1484 = vand.u32 %v1072, 4294901760
          %v1485 = vsub.f32 %v1072, %v1484
          %1486 = vmatpush1.msra.mxu0 %v1485
          %v1487 = vand.u32 %v1075, 4294901760
          %v1488 = vsub.f32 %v1075, %v1487
          %1489 = vmatprep.subr.mxu0 %v1488
          %v1490 = vand.u32 %v1074, 4294901760
          %v1491 = vsub.f32 %v1074, %v1490
          %1492 = vmatpush1.msra.mxu0 %v1491
          %v1493 = vand.u32 %v1077, 4294901760
          %v1494 = vsub.f32 %v1077, %v1493
          %1495 = vmatprep.subr.mxu0 %v1494
          %v1496 = vand.u32 %v1076, 4294901760
          %v1497 = vsub.f32 %v1076, %v1496
          %1498 = vmatpush1.msra.mxu0 %v1497
          %v1499 = vand.u32 %v1079, 4294901760
          %v1500 = vsub.f32 %v1079, %v1499
          %1501 = vmatprep.subr.mxu0 %v1500
          %v1502 = vand.u32 %v1078, 4294901760
          %v1503 = vsub.f32 %v1078, %v1502
          %1504 = vmatpush1.msra.mxu0 %v1503
          %v1505 = vand.u32 %v1081, 4294901760
          %v1506 = vsub.f32 %v1081, %v1505
          %1507 = vmatprep.subr.mxu0 %v1506
          %v1508 = vand.u32 %v1080, 4294901760
          %v1509 = vsub.f32 %v1080, %v1508
          %1510 = vmatpush1.msra.mxu0 %v1509
          %v1511 = vand.u32 %v1083, 4294901760
          %v1512 = vsub.f32 %v1083, %v1511
          %1513 = vmatprep.subr.mxu0 %v1512
          %v1514 = vand.u32 %v1082, 4294901760
          %v1515 = vsub.f32 %v1082, %v1514
          %1516 = vmatpush1.msra.mxu0 %v1515
          %v1517 = vand.u32 %v1085, 4294901760
          %v1518 = vsub.f32 %v1085, %v1517
          %1519 = vmatprep.subr.mxu0 %v1518
          %v1520 = vand.u32 %v1084, 4294901760
          %v1521 = vsub.f32 %v1084, %v1520
          %1522 = vmatpush1.msra.mxu0 %v1521
          %1523 = vmatprep.subr.mxu0 0.0
          %1524 = vmatpush1.msra.mxu0 0.0
          %1525 = vmatprep.subr.mxu0 0.0
          %1526 = vmatpush1.msra.mxu0 0.0
          %1527 = vmatprep.subr.mxu0 0.0
          %1528 = vmatpush1.msra.mxu0 0.0
          %1529 = vmatprep.subr.mxu0 0.0
          %1530 = vmatpush1.msra.mxu0 0.0
          %1531 = vmatprep.subr.mxu0 0.0
          %1532 = vmatpush1.msra.mxu0 0.0
          %1533 = vmatprep.subr.mxu0 0.0
          %1534 = vmatpush1.msra.mxu0 0.0
          %1535 = vmatprep.subr.mxu0 0.0
          %1536 = vmatpush1.msra.mxu0 0.0
          %1537 = vmatprep.subr.mxu0 0.0
          %1538 = vmatpush1.msra.mxu0 0.0
          %1539 = vmatprep.subr.mxu0 0.0
          %1540 = vmatpush1.msra.mxu0 0.0
          %1541 = vmatprep.subr.mxu0 0.0
          %1542 = vmatpush1.msra.mxu0 0.0
          %1543 = vmatprep.subr.mxu0 0.0
          %1544 = vmatpush1.msra.mxu0 0.0
          %1545 = vmatprep.subr.mxu0 0.0
          %1546 = vmatpush1.msra.mxu0 0.0
          %1547 = vmatprep.subr.mxu0 0.0
          %1548 = vmatpush1.msra.mxu0 0.0
          %1549 = vmatprep.subr.mxu0 0.0
          %1550 = vmatpush1.msra.mxu0 0.0
          %1551 = vmatprep.subr.mxu0 0.0
          %1552 = vmatpush1.msra.mxu0 0.0
          %1553 = vmatprep.subr.mxu0 0.0
          %1554 = vmatpush1.msra.mxu0 0.0
          %1555 = vmatprep.mubr.f32.mxu0 0.0
          %v1556 = vand.u32 %v1086, 4294901760
          %v1557 = vsub.f32 %v1086, %v1556
          %1558 = vmatmul.mubr.f32.gmra.mrb[0].mxu0 %v1557
          %v1559 = vpop.f32.mrb[0].mxu0
          %v1560 = vadd.f32 %v1423, %v1559
          %v1561 = vpop.f32.mrb[0].mxu0
          %v1562 = vadd.f32 %v1425, %v1561
          %1563 = vdwg.mxu0
          %v1564 = vand.u32 %v1055, 4294901760
          %1565 = vmatprep.subr.mxu0 %v1564
          %v1566 = vand.u32 %v1054, 4294901760
          %1567 = vmatpush1.msra.mxu0 %v1566
          %v1568 = vand.u32 %v1057, 4294901760
          %1569 = vmatprep.subr.mxu0 %v1568
          %v1570 = vand.u32 %v1056, 4294901760
          %1571 = vmatpush1.msra.mxu0 %v1570
          %v1572 = vand.u32 %v1059, 4294901760
          %1573 = vmatprep.subr.mxu0 %v1572
          %v1574 = vand.u32 %v1058, 4294901760
          %1575 = vmatpush1.msra.mxu0 %v1574
          %v1576 = vand.u32 %v1061, 4294901760
          %1577 = vmatprep.subr.mxu0 %v1576
          %v1578 = vand.u32 %v1060, 4294901760
          %1579 = vmatpush1.msra.mxu0 %v1578
          %v1580 = vand.u32 %v1063, 4294901760
          %1581 = vmatprep.subr.mxu0 %v1580
          %v1582 = vand.u32 %v1062, 4294901760
          %1583 = vmatpush1.msra.mxu0 %v1582
          %v1584 = vand.u32 %v1065, 4294901760
          %1585 = vmatprep.subr.mxu0 %v1584
          %v1586 = vand.u32 %v1064, 4294901760
          %1587 = vmatpush1.msra.mxu0 %v1586
          %v1588 = vand.u32 %v1067, 4294901760
          %1589 = vmatprep.subr.mxu0 %v1588
          %v1590 = vand.u32 %v1066, 4294901760
          %1591 = vmatpush1.msra.mxu0 %v1590
          %v1592 = vand.u32 %v1069, 4294901760
          %1593 = vmatprep.subr.mxu0 %v1592
          %v1594 = vand.u32 %v1068, 4294901760
          %1595 = vmatpush1.msra.mxu0 %v1594
          %v1596 = vand.u32 %v1071, 4294901760
          %1597 = vmatprep.subr.mxu0 %v1596
          %v1598 = vand.u32 %v1070, 4294901760
          %1599 = vmatpush1.msra.mxu0 %v1598
          %v1600 = vand.u32 %v1073, 4294901760
          %1601 = vmatprep.subr.mxu0 %v1600
          %v1602 = vand.u32 %v1072, 4294901760
          %1603 = vmatpush1.msra.mxu0 %v1602
          %v1604 = vand.u32 %v1075, 4294901760
          %1605 = vmatprep.subr.mxu0 %v1604
          %v1606 = vand.u32 %v1074, 4294901760
          %1607 = vmatpush1.msra.mxu0 %v1606
          %v1608 = vand.u32 %v1077, 4294901760
          %1609 = vmatprep.subr.mxu0 %v1608
          %v1610 = vand.u32 %v1076, 4294901760
          %1611 = vmatpush1.msra.mxu0 %v1610
          %v1612 = vand.u32 %v1079, 4294901760
          %1613 = vmatprep.subr.mxu0 %v1612
          %v1614 = vand.u32 %v1078, 4294901760
          %1615 = vmatpush1.msra.mxu0 %v1614
          %v1616 = vand.u32 %v1081, 4294901760
          %1617 = vmatprep.subr.mxu0 %v1616
          %v1618 = vand.u32 %v1080, 4294901760
          %1619 = vmatpush1.msra.mxu0 %v1618
          %v1620 = vand.u32 %v1083, 4294901760
          %1621 = vmatprep.subr.mxu0 %v1620
          %v1622 = vand.u32 %v1082, 4294901760
          %1623 = vmatpush1.msra.mxu0 %v1622
          %v1624 = vand.u32 %v1085, 4294901760
          %1625 = vmatprep.subr.mxu0 %v1624
          %v1626 = vand.u32 %v1084, 4294901760
          %1627 = vmatpush1.msra.mxu0 %v1626
          %1628 = vmatprep.subr.mxu0 0.0
          %1629 = vmatpush1.msra.mxu0 0.0
          %1630 = vmatprep.subr.mxu0 0.0
          %1631 = vmatpush1.msra.mxu0 0.0
          %1632 = vmatprep.subr.mxu0 0.0
          %1633 = vmatpush1.msra.mxu0 0.0
          %1634 = vmatprep.subr.mxu0 0.0
          %1635 = vmatpush1.msra.mxu0 0.0
          %1636 = vmatprep.subr.mxu0 0.0
          %1637 = vmatpush1.msra.mxu0 0.0
          %1638 = vmatprep.subr.mxu0 0.0
          %1639 = vmatpush1.msra.mxu0 0.0
          %1640 = vmatprep.subr.mxu0 0.0
          %1641 = vmatpush1.msra.mxu0 0.0
          %1642 = vmatprep.subr.mxu0 0.0
          %1643 = vmatpush1.msra.mxu0 0.0
          %1644 = vmatprep.subr.mxu0 0.0
          %1645 = vmatpush1.msra.mxu0 0.0
          %1646 = vmatprep.subr.mxu0 0.0
          %1647 = vmatpush1.msra.mxu0 0.0
          %1648 = vmatprep.subr.mxu0 0.0
          %1649 = vmatpush1.msra.mxu0 0.0
          %1650 = vmatprep.subr.mxu0 0.0
          %1651 = vmatpush1.msra.mxu0 0.0
          %1652 = vmatprep.subr.mxu0 0.0
          %1653 = vmatpush1.msra.mxu0 0.0
          %1654 = vmatprep.subr.mxu0 0.0
          %1655 = vmatpush1.msra.mxu0 0.0
          %1656 = vmatprep.subr.mxu0 0.0
          %1657 = vmatpush1.msra.mxu0 0.0
          %1658 = vmatprep.subr.mxu0 0.0
          %1659 = vmatpush1.msra.mxu0 0.0
          %1660 = vmatprep.mubr.f32.mxu0 0.0
          %v1661 = vand.u32 %v1086, 4294901760
          %v1662 = vsub.f32 %v1086, %v1661
          %v1663 = vand.u32 %v1662, 4294901760
          %1664 = vmatmul.mubr.f32.gmra.mrb[0].mxu0 %v1663
          %v1665 = vpop.f32.mrb[0].mxu0
          %v1666 = vadd.f32 %v1560, %v1665
          %v1667 = vpop.f32.mrb[0].mxu0
          %v1668 = vadd.f32 %v1562, %v1667
          %1669 = vdwg.mxu0
          %v1670 = vand.u32 %v1055, 4294901760
          %v1671 = vsub.f32 %v1055, %v1670
          %v1672 = vand.u32 %v1671, 4294901760
          %1673 = vmatprep.subr.mxu0 %v1672
          %v1674 = vand.u32 %v1054, 4294901760
          %v1675 = vsub.f32 %v1054, %v1674
          %v1676 = vand.u32 %v1675, 4294901760
          %1677 = vmatpush1.msra.mxu0 %v1676
          %v1678 = vand.u32 %v1057, 4294901760
          %v1679 = vsub.f32 %v1057, %v1678
          %v1680 = vand.u32 %v1679, 4294901760
          %1681 = vmatprep.subr.mxu0 %v1680
          %v1682 = vand.u32 %v1056, 4294901760
          %v1683 = vsub.f32 %v1056, %v1682
          %v1684 = vand.u32 %v1683, 4294901760
          %1685 = vmatpush1.msra.mxu0 %v1684
          %v1686 = vand.u32 %v1059, 4294901760
          %v1687 = vsub.f32 %v1059, %v1686
          %v1688 = vand.u32 %v1687, 4294901760
          %1689 = vmatprep.subr.mxu0 %v1688
          %v1690 = vand.u32 %v1058, 4294901760
          %v1691 = vsub.f32 %v1058, %v1690
          %v1692 = vand.u32 %v1691, 4294901760
          %1693 = vmatpush1.msra.mxu0 %v1692
          %v1694 = vand.u32 %v1061, 4294901760
          %v1695 = vsub.f32 %v1061, %v1694
          %v1696 = vand.u32 %v1695, 4294901760
          %1697 = vmatprep.subr.mxu0 %v1696
          %v1698 = vand.u32 %v1060, 4294901760
          %v1699 = vsub.f32 %v1060, %v1698
          %v1700 = vand.u32 %v1699, 4294901760
          %1701 = vmatpush1.msra.mxu0 %v1700
          %v1702 = vand.u32 %v1063, 4294901760
          %v1703 = vsub.f32 %v1063, %v1702
          %v1704 = vand.u32 %v1703, 4294901760
          %1705 = vmatprep.subr.mxu0 %v1704
          %v1706 = vand.u32 %v1062, 4294901760
          %v1707 = vsub.f32 %v1062, %v1706
          %v1708 = vand.u32 %v1707, 4294901760
          %1709 = vmatpush1.msra.mxu0 %v1708
          %v1710 = vand.u32 %v1065, 4294901760
          %v1711 = vsub.f32 %v1065, %v1710
          %v1712 = vand.u32 %v1711, 4294901760
          %1713 = vmatprep.subr.mxu0 %v1712
          %v1714 = vand.u32 %v1064, 4294901760
          %v1715 = vsub.f32 %v1064, %v1714
          %v1716 = vand.u32 %v1715, 4294901760
          %1717 = vmatpush1.msra.mxu0 %v1716
          %v1718 = vand.u32 %v1067, 4294901760
          %v1719 = vsub.f32 %v1067, %v1718
          %v1720 = vand.u32 %v1719, 4294901760
          %1721 = vmatprep.subr.mxu0 %v1720
          %v1722 = vand.u32 %v1066, 4294901760
          %v1723 = vsub.f32 %v1066, %v1722
          %v1724 = vand.u32 %v1723, 4294901760
          %1725 = vmatpush1.msra.mxu0 %v1724
          %v1726 = vand.u32 %v1069, 4294901760
          %v1727 = vsub.f32 %v1069, %v1726
          %v1728 = vand.u32 %v1727, 4294901760
          %1729 = vmatprep.subr.mxu0 %v1728
          %v1730 = vand.u32 %v1068, 4294901760
          %v1731 = vsub.f32 %v1068, %v1730
          %v1732 = vand.u32 %v1731, 4294901760
          %1733 = vmatpush1.msra.mxu0 %v1732
          %v1734 = vand.u32 %v1071, 4294901760
          %v1735 = vsub.f32 %v1071, %v1734
          %v1736 = vand.u32 %v1735, 4294901760
          %1737 = vmatprep.subr.mxu0 %v1736
          %v1738 = vand.u32 %v1070, 4294901760
          %v1739 = vsub.f32 %v1070, %v1738
          %v1740 = vand.u32 %v1739, 4294901760
          %1741 = vmatpush1.msra.mxu0 %v1740
          %v1742 = vand.u32 %v1073, 4294901760
          %v1743 = vsub.f32 %v1073, %v1742
          %v1744 = vand.u32 %v1743, 4294901760
          %1745 = vmatprep.subr.mxu0 %v1744
          %v1746 = vand.u32 %v1072, 4294901760
          %v1747 = vsub.f32 %v1072, %v1746
          %v1748 = vand.u32 %v1747, 4294901760
          %1749 = vmatpush1.msra.mxu0 %v1748
          %v1750 = vand.u32 %v1075, 4294901760
          %v1751 = vsub.f32 %v1075, %v1750
          %v1752 = vand.u32 %v1751, 4294901760
          %1753 = vmatprep.subr.mxu0 %v1752
          %v1754 = vand.u32 %v1074, 4294901760
          %v1755 = vsub.f32 %v1074, %v1754
          %v1756 = vand.u32 %v1755, 4294901760
          %1757 = vmatpush1.msra.mxu0 %v1756
          %v1758 = vand.u32 %v1077, 4294901760
          %v1759 = vsub.f32 %v1077, %v1758
          %v1760 = vand.u32 %v1759, 4294901760
          %1761 = vmatprep.subr.mxu0 %v1760
          %v1762 = vand.u32 %v1076, 4294901760
          %v1763 = vsub.f32 %v1076, %v1762
          %v1764 = vand.u32 %v1763, 4294901760
          %1765 = vmatpush1.msra.mxu0 %v1764
          %v1766 = vand.u32 %v1079, 4294901760
          %v1767 = vsub.f32 %v1079, %v1766
          %v1768 = vand.u32 %v1767, 4294901760
          %1769 = vmatprep.subr.mxu0 %v1768
          %v1770 = vand.u32 %v1078, 4294901760
          %v1771 = vsub.f32 %v1078, %v1770
          %v1772 = vand.u32 %v1771, 4294901760
          %1773 = vmatpush1.msra.mxu0 %v1772
          %v1774 = vand.u32 %v1081, 4294901760
          %v1775 = vsub.f32 %v1081, %v1774
          %v1776 = vand.u32 %v1775, 4294901760
          %1777 = vmatprep.subr.mxu0 %v1776
          %v1778 = vand.u32 %v1080, 4294901760
          %v1779 = vsub.f32 %v1080, %v1778
          %v1780 = vand.u32 %v1779, 4294901760
          %1781 = vmatpush1.msra.mxu0 %v1780
          %v1782 = vand.u32 %v1083, 4294901760
          %v1783 = vsub.f32 %v1083, %v1782
          %v1784 = vand.u32 %v1783, 4294901760
          %1785 = vmatprep.subr.mxu0 %v1784
          %v1786 = vand.u32 %v1082, 4294901760
          %v1787 = vsub.f32 %v1082, %v1786
          %v1788 = vand.u32 %v1787, 4294901760
          %1789 = vmatpush1.msra.mxu0 %v1788
          %v1790 = vand.u32 %v1085, 4294901760
          %v1791 = vsub.f32 %v1085, %v1790
          %v1792 = vand.u32 %v1791, 4294901760
          %1793 = vmatprep.subr.mxu0 %v1792
          %v1794 = vand.u32 %v1084, 4294901760
          %v1795 = vsub.f32 %v1084, %v1794
          %v1796 = vand.u32 %v1795, 4294901760
          %1797 = vmatpush1.msra.mxu0 %v1796
          %1798 = vmatprep.subr.mxu0 0.0
          %1799 = vmatpush1.msra.mxu0 0.0
          %1800 = vmatprep.subr.mxu0 0.0
          %1801 = vmatpush1.msra.mxu0 0.0
          %1802 = vmatprep.subr.mxu0 0.0
          %1803 = vmatpush1.msra.mxu0 0.0
          %1804 = vmatprep.subr.mxu0 0.0
          %1805 = vmatpush1.msra.mxu0 0.0
          %1806 = vmatprep.subr.mxu0 0.0
          %1807 = vmatpush1.msra.mxu0 0.0
          %1808 = vmatprep.subr.mxu0 0.0
          %1809 = vmatpush1.msra.mxu0 0.0
          %1810 = vmatprep.subr.mxu0 0.0
          %1811 = vmatpush1.msra.mxu0 0.0
          %1812 = vmatprep.subr.mxu0 0.0
          %1813 = vmatpush1.msra.mxu0 0.0
          %1814 = vmatprep.subr.mxu0 0.0
          %1815 = vmatpush1.msra.mxu0 0.0
          %1816 = vmatprep.subr.mxu0 0.0
          %1817 = vmatpush1.msra.mxu0 0.0
          %1818 = vmatprep.subr.mxu0 0.0
          %1819 = vmatpush1.msra.mxu0 0.0
          %1820 = vmatprep.subr.mxu0 0.0
          %1821 = vmatpush1.msra.mxu0 0.0
          %1822 = vmatprep.subr.mxu0 0.0
          %1823 = vmatpush1.msra.mxu0 0.0
          %1824 = vmatprep.subr.mxu0 0.0
          %1825 = vmatpush1.msra.mxu0 0.0
          %1826 = vmatprep.subr.mxu0 0.0
          %1827 = vmatpush1.msra.mxu0 0.0
          %1828 = vmatprep.subr.mxu0 0.0
          %1829 = vmatpush1.msra.mxu0 0.0
          %1830 = vmatprep.mubr.f32.mxu0 0.0
          %v1831 = vand.u32 %v1086, 4294901760
          %1832 = vmatmul.mubr.f32.gmra.mrb[0].mxu0 %v1831
          %v1833 = vpop.f32.mrb[0].mxu0
          %v1834 = vadd.f32 %v1666, %v1833
          %v1835 = vpop.f32.mrb[0].mxu0
          %v1836 = vadd.f32 %v1668, %v1835
          %1837 = vdwg.mxu0
          %v1838 = vand.u32 %v1055, 4294901760
          %1839 = vmatprep.subr.mxu0 %v1838
          %v1840 = vand.u32 %v1054, 4294901760
          %1841 = vmatpush1.msra.mxu0 %v1840
          %v1842 = vand.u32 %v1057, 4294901760
          %1843 = vmatprep.subr.mxu0 %v1842
          %v1844 = vand.u32 %v1056, 4294901760
          %1845 = vmatpush1.msra.mxu0 %v1844
          %v1846 = vand.u32 %v1059, 4294901760
          %1847 = vmatprep.subr.mxu0 %v1846
          %v1848 = vand.u32 %v1058, 4294901760
          %1849 = vmatpush1.msra.mxu0 %v1848
          %v1850 = vand.u32 %v1061, 4294901760
          %1851 = vmatprep.subr.mxu0 %v1850
          %v1852 = vand.u32 %v1060, 4294901760
          %1853 = vmatpush1.msra.mxu0 %v1852
          %v1854 = vand.u32 %v1063, 4294901760
          %1855 = vmatprep.subr.mxu0 %v1854
          %v1856 = vand.u32 %v1062, 4294901760
          %1857 = vmatpush1.msra.mxu0 %v1856
          %v1858 = vand.u32 %v1065, 4294901760
          %1859 = vmatprep.subr.mxu0 %v1858
          %v1860 = vand.u32 %v1064, 4294901760
          %1861 = vmatpush1.msra.mxu0 %v1860
          %v1862 = vand.u32 %v1067, 4294901760
          %1863 = vmatprep.subr.mxu0 %v1862
          %v1864 = vand.u32 %v1066, 4294901760
          %1865 = vmatpush1.msra.mxu0 %v1864
          %v1866 = vand.u32 %v1069, 4294901760
          %1867 = vmatprep.subr.mxu0 %v1866
          %v1868 = vand.u32 %v1068, 4294901760
          %1869 = vmatpush1.msra.mxu0 %v1868
          %v1870 = vand.u32 %v1071, 4294901760
          %1871 = vmatprep.subr.mxu0 %v1870
          %v1872 = vand.u32 %v1070, 4294901760
          %1873 = vmatpush1.msra.mxu0 %v1872
          %v1874 = vand.u32 %v1073, 4294901760
          %1875 = vmatprep.subr.mxu0 %v1874
          %v1876 = vand.u32 %v1072, 4294901760
          %1877 = vmatpush1.msra.mxu0 %v1876
          %v1878 = vand.u32 %v1075, 4294901760
          %1879 = vmatprep.subr.mxu0 %v1878
          %v1880 = vand.u32 %v1074, 4294901760
          %1881 = vmatpush1.msra.mxu0 %v1880
          %v1882 = vand.u32 %v1077, 4294901760
          %1883 = vmatprep.subr.mxu0 %v1882
          %v1884 = vand.u32 %v1076, 4294901760
          %1885 = vmatpush1.msra.mxu0 %v1884
          %v1886 = vand.u32 %v1079, 4294901760
          %1887 = vmatprep.subr.mxu0 %v1886
          %v1888 = vand.u32 %v1078, 4294901760
          %1889 = vmatpush1.msra.mxu0 %v1888
          %v1890 = vand.u32 %v1081, 4294901760
          %1891 = vmatprep.subr.mxu0 %v1890
          %v1892 = vand.u32 %v1080, 4294901760
          %1893 = vmatpush1.msra.mxu0 %v1892
          %v1894 = vand.u32 %v1083, 4294901760
          %1895 = vmatprep.subr.mxu0 %v1894
          %v1896 = vand.u32 %v1082, 4294901760
          %1897 = vmatpush1.msra.mxu0 %v1896
          %v1898 = vand.u32 %v1085, 4294901760
          %1899 = vmatprep.subr.mxu0 %v1898
          %v1900 = vand.u32 %v1084, 4294901760
          %1901 = vmatpush1.msra.mxu0 %v1900
          %1902 = vmatprep.subr.mxu0 0.0
          %1903 = vmatpush1.msra.mxu0 0.0
          %1904 = vmatprep.subr.mxu0 0.0
          %1905 = vmatpush1.msra.mxu0 0.0
          %1906 = vmatprep.subr.mxu0 0.0
          %1907 = vmatpush1.msra.mxu0 0.0
          %1908 = vmatprep.subr.mxu0 0.0
          %1909 = vmatpush1.msra.mxu0 0.0
          %1910 = vmatprep.subr.mxu0 0.0
          %1911 = vmatpush1.msra.mxu0 0.0
          %1912 = vmatprep.subr.mxu0 0.0
          %1913 = vmatpush1.msra.mxu0 0.0
          %1914 = vmatprep.subr.mxu0 0.0
          %1915 = vmatpush1.msra.mxu0 0.0
          %1916 = vmatprep.subr.mxu0 0.0
          %1917 = vmatpush1.msra.mxu0 0.0
          %1918 = vmatprep.subr.mxu0 0.0
          %1919 = vmatpush1.msra.mxu0 0.0
          %1920 = vmatprep.subr.mxu0 0.0
          %1921 = vmatpush1.msra.mxu0 0.0
          %1922 = vmatprep.subr.mxu0 0.0
          %1923 = vmatpush1.msra.mxu0 0.0
          %1924 = vmatprep.subr.mxu0 0.0
          %1925 = vmatpush1.msra.mxu0 0.0
          %1926 = vmatprep.subr.mxu0 0.0
          %1927 = vmatpush1.msra.mxu0 0.0
          %1928 = vmatprep.subr.mxu0 0.0
          %1929 = vmatpush1.msra.mxu0 0.0
          %1930 = vmatprep.subr.mxu0 0.0
          %1931 = vmatpush1.msra.mxu0 0.0
          %1932 = vmatprep.subr.mxu0 0.0
          %1933 = vmatpush1.msra.mxu0 0.0
          %1934 = vmatprep.mubr.f32.mxu0 0.0
          %v1935 = vand.u32 %v1086, 4294901760
          %1936 = vmatmul.mubr.f32.gmra.mrb[0].mxu0 %v1935
          %v1937 = vpop.f32.mrb[0].mxu0
          %v1938 = vadd.f32 %v1834, %v1937
          %v1939 = vpop.f32.mrb[0].mxu0
          %v1940 = vadd.f32 %v1836, %v1939
          %1941 = vdwg.mxu0
          %vm1942 = vcmp.gt.f32.partialorder %v1938, 0.0
          %vm1943 = vcmp.gt.f32.partialorder %v1940, 0.0
          %v1944 = vsel %vm1942, %v1938, 1.0
          %v1945 = vsel %vm1943, %v1940, 1.0
          %v1946 = vrcp.pop %v1944
          %v1947 = vrcp.pop %v1945
          %v1948 = vlaneseq
          %v1949 = vshrl.u32 %v1948, 7
          %v1950 = vsub.s32 3, %v1949
          %v1951 = vrot.slane %v1946, %v1950
          %v1952 = vlaneseq
          %v1953 = vshrl.u32 %v1952, 7
          %v1954 = vsub.s32 3, %v1953
          %v1955 = vrot.slane %v1947, %v1954
          %v1956 = vmul.f32 %v1938, %v1951
          %v1957 = vmul.f32 %v1940, %v1955
          %v1958 = vsel %vm1942, 1, 0
          %v1959 = vsel %vm1943, 1, 0
          %v1960 = vcvt.s32.f32 %v1958
          %v1961 = vcvt.s32.f32 %v1959
          %v1962 = vmul.f32 %v1960, 0.75
          %v1963 = vmul.f32 %v1961, 0.75
          %v1964 = vld [vmem:[%s294] sm:$0x77]
          %v1966 = vcombine.high %v1964, %v1964
          %v1968 = vsub.f32 %v1956, %v1964
          %v1969 = vsub.f32 %v1957, %v1966
          %v1970 = vlaneseq
          %v1971 = vshrl.u32 %v1970, 7
          %v1972 = vsub.s32 3, %v1971
          %v1973 = vrot.slane %v1962, %v1972
          %v1974 = vlaneseq
          %v1975 = vshrl.u32 %v1974, 7
          %v1976 = vsub.s32 3, %v1975
          %v1977 = vrot.slane %v1963, %v1976
          %v1978 = vmul.f32 %v1973, %v1968
          %v1979 = vmul.f32 %v1977, %v1969
          %v1982 = vcombine.low %v1978, %v1979
          %v1984 = vadd.f32 %v1964, %v1982
          %1985 = vst [vmem:[%s328] sm:$0x77] %v1984
        $region60: #{tpu_custom_call.1} parent=35 // pred_fallthru
          _
        %s1986 = sand.u32 %s155, 1
        %s1987 = scalar_lea.sflag [#allocation6], %s1986
        %s1988 = sand.u32 %s155, 1
        %s1989 = smul.addr %s1988, 8
        %s1990 = scalar_lea.vmem [#allocation12], %s1989
        // Predicated region
        $region61: #{tpu_custom_call.1} parent=35 // pred_check
          %p1991 = pneg %p165
        $region62: #{tpu_custom_call.1} parent=35 // pred_check_branch
          %1993 = sbr.rel (%p1991) target = $region64
        $region63: #{tpu_custom_call.1} parent=35 // pred_region
          %s1994 = smul.u32 2, %s37
          %s1996 = ssub.s32 128, 128
          %1997 = vsyncadd %s1987, %s1996
          %s1998 = smul.addr %s36, 2
          %s1999 = sadd.s32 %s1994, %s1998
          %s2000 = smul.addr %s1999, 64
          %s2001 = scalar_lea.hbm %s5, %s2000
          %s2003 = sshll.u32 %s1990, 4
          %s2004 = int_to_ptr.vmem [resolvable:$true] %s2003
          %2006 = dma.vmem_to_hbm [thread:$0]  %s2004, 128, %s2001, %s1987
        $region64: #{tpu_custom_call.1} parent=35 // pred_fallthru
          _
      $region36: #{tpu_custom_call.1} parent=5 // pred_fallthru
        _
      %p2007 = scmp.le.s32.totalorder 2, %s27
      // Predicated region
      $region65: #{tpu_custom_call.1} parent=5 // pred_check
        %p2008 = pneg %p2007
      $region66: #{tpu_custom_call.1} parent=5 // pred_check_branch
        %2010 = sbr.rel (%p2008) target = $region68
      $region67: #{tpu_custom_call.1} parent=5 // pred_region
        %s2011 = ssub.s32 %s27, 2
        // Predicated region
        $region69: #{tpu_custom_call.1} parent=67 // pred_check
          %p2012 = pneg %p171
        $region70: #{tpu_custom_call.1} parent=67 // pred_check_branch
          %2014 = sbr.rel (%p2012) target = $region72
        $region71: #{tpu_custom_call.1} parent=67 // pred_region
          %s2015 = sand.u32 %s156, 1
          %s2016 = scalar_lea.sflag [#allocation6], %s2015
          %s2017 = sand.u32 %s156, 1
          %s2018 = smul.addr %s2017, 8
          %s2019 = scalar_lea.vmem [#allocation12], %s2018
          %2020 = dma.done %s2016, 128
        $region72: #{tpu_custom_call.1} parent=67 // pred_fallthru
          _
      $region68: #{tpu_custom_call.1} parent=5 // pred_fallthru
        _
    $region6: #{tpu_custom_call.1} parent=1 // loop_footer
      %s31 = sadd.s32 1, %s27
    $region7: #{tpu_custom_call.1} parent=1 // loop_footer_branch
      %26 = sbr.rel target = $region3
    $region8: #{tpu_custom_call.1} parent=1 // loop_exit
      _
    %2021 = vsyncpa [#allocation5], 1
    %s2022 = scalar_lea.sflag [#allocation5], 1
    %2023 = vsyncpa %s2022, 1
    %2024 = vsyncpa [#allocation8], 1
    %s2025 = scalar_lea.sflag [#allocation8], 1
    %2026 = vsyncpa %s2025, 1
    %2027 = vsyncpa [#allocation11], 1
    %s2028 = scalar_lea.sflag [#allocation11], 1
    %2029 = vsyncpa %s2028, 1
    %2030 = vsyncpa [#allocation6], 1
    %s2031 = scalar_lea.sflag [#allocation6], 1
    %2032 = vsyncpa %s2031, 1

</llo_original>
